<compile_context>
chip_gen: v6e
topology: v6e:2x2x1
jax: 0.10.0
libtpu: 0.0.40
codegen_flags: <defaults>
</compile_context>

<pallas_src>
import functools

import jax
import jax.numpy as jnp
from jax.experimental import pallas as pl
from jax.experimental.pallas import tpu as pltpu

EPS = 1e-5  # nn.InstanceNorm2d default eps


def _residual_block_kernel(x_ref, w1_ref, w2_ref, p_ref, out_ref, *, H, W, B, mm_dtype):
    # x_ref  : (B, C, H*W)  B samples, channels on sublanes, flattened HW on lanes
    # w*_ref : (C, 9*C)     conv weights in im2col layout (Cout, tap-major / cin-minor), mm_dtype
    # p_ref  : (C, 4)       packed InstanceNorm affine params: [gamma1, beta1, gamma2, beta2]
    # out_ref: (B, C, H*W)
    C = x_ref.shape[1]
    HW = x_ref.shape[2]
    P = W + 1  # max |flattened shift| of a 3x3 tap

    # Only the column-wrap masks are needed: with the P = W+1 zero pad, taps that fall
    # above/below the image already read zeros from the pad.
    colm = jax.lax.broadcasted_iota(jnp.int32, (1, HW), 1) % W
    mask_left = colm >= 1           # for kx == 0  (dx = -1)
    mask_right = colm <= W - 2      # for kx == 2  (dx = +1)

    zpad = jnp.zeros((C, P), mm_dtype)

    def im2col(a):
        # a: (C, HW) -> (9C, HW) patch matrix in mm_dtype:
        # patch_{ky,kx}[i] = a[i + dy*W + dx], zero where the window leaves the image.
        a = a.astype(mm_dtype)
        ae = jnp.concatenate([zpad, a, zpad], axis=1)            # (C, HW + 2P)
        parts = []
        for ky in range(3):
            for kx in range(3):
                delta = (ky - 1) * W + (kx - 1)
                patch = ae[:, P + delta:P + delta + HW]          # static lane slice
                if kx == 0:
                    patch = jnp.where(mask_left, patch, 0)
                elif kx == 2:
                    patch = jnp.where(mask_right, patch, 0)
                parts.append(patch)
        return jnp.concatenate(parts, axis=0)                    # (9C, HW)

    g1 = p_ref[:, 0:1]
    b1 = p_ref[:, 1:2]
    g2 = p_ref[:, 2:3]
    b2 = p_ref[:, 3:4]

    def instance_norm(y, g, b):
        # y: (C, HW) f32. Biased variance, eps inside rsqrt (EUP), affine folded into
        # per-channel scale/shift -> only 2 full-(C,HW) VPU ops (mul, add).
        mean = jnp.mean(y, axis=-1, keepdims=True)
        var = jnp.mean(jnp.square(y - mean), axis=-1, keepdims=True)
        scale = g * jax.lax.rsqrt(var + EPS)                     # (C, 1)
        shift = b - mean * scale                                 # (C, 1)
        return y * scale + shift

    # ---- conv1: one (C, 9C) @ (9C, B*HW) MXU matmul over all B samples ----
    rhs1 = jnp.concatenate([im2col(x_ref[s]) for s in range(B)], axis=1)   # (9C, B*HW)
    y1 = jnp.dot(w1_ref[...], rhs1, preferred_element_type=jnp.float32)    # (C, B*HW) f32

    # ---- IN1 + ReLU per sample (stats are per (sample, channel)), then conv2 rhs ----
    h_parts = []
    for s in range(B):
        ys = y1[:, s * HW:(s + 1) * HW]                          # lane-aligned static slice
        hs = jnp.maximum(instance_norm(ys, g1, b1), 0.0)
        h_parts.append(im2col(hs))
    rhs2 = jnp.concatenate(h_parts, axis=1)                      # (9C, B*HW)
    y2 = jnp.dot(w2_ref[...], rhs2, preferred_element_type=jnp.float32)    # (C, B*HW) f32

    # ---- IN2 + residual add, per sample (re-read x_ref to keep live ranges short) ----
    for s in range(B):
        ys = y2[:, s * HW:(s + 1) * HW]
        out_ref[s] = x_ref[s] + instance_norm(ys, g2, b2)


def _pick_samples_per_step(N, C, HW, patch_itemsize):
    """Largest divisor of N that (a) keeps the per-step working set small and (b) leaves
    a grid of length >= 2 when possible (v7x has 2 TensorCores)."""
    per_sample = 4 * C * HW * 4 + 2 * 9 * C * HW * patch_itemsize   # rough bytes / sample
    budget = 16 << 20                                               # VMEM headroom (v7x: 64 MiB)
    max_b = int(max(1, min(16, budget // max(per_sample, 1))))
    divisors = [d for d in range(1, N + 1) if N % d == 0 and d <= max_b]
    pref = [d for d in divisors if N // d >= 2]
    return max(pref) if pref else max(divisors)


def residual_block(x_nchw, w1, g1, b1, w2, g2, b2, *,
                   matmul_dtype=jnp.float32, samples_per_step=None):
    """x_nchw: (N, C, H, W). w1/w2: (C, C, 3, 3) PyTorch OIHW. Returns (N, C, H, W).

    matmul_dtype=jnp.bfloat16 casts only the MXU operands (weights + im2col patches);
    accumulation, InstanceNorm, ReLU and the residual add stay f32.
    """
    N, C, H, W = x_nchw.shape
    HW = H * W
    patch_itemsize = jnp.dtype(matmul_dtype).itemsize

    B = samples_per_step or _pick_samples_per_step(N, C, HW, patch_itemsize)
    assert N % B == 0, "samples_per_step must divide the batch size"
    grid_len = N // B

    # NCHW with HW flattened IS the kernel layout -> only free reshapes in the wrapper.
    x = x_nchw.reshape(N, C, HW).astype(jnp.float32)
    # Weights pre-reshaped once in XLA to the fused im2col layout (Cout, 9*Cin),
    # tap-major / cin-minor, cast to the matmul operand dtype.
    w1m = jnp.transpose(w1, (0, 2, 3, 1)).reshape(C, 9 * C).astype(matmul_dtype)
    w2m = jnp.transpose(w2, (0, 2, 3, 1)).reshape(C, 9 * C).astype(matmul_dtype)
    # All four affine vectors packed into one (C, 4) operand -> one DMA / one VMEM tile.
    params = jnp.stack([g1, b1, g2, b2], axis=1).astype(jnp.float32)       # (C, 4)

    # Explicit VMEM budget from the per-step working set (clamped to v7x's 64 MiB).
    step_bytes = (2 * 2 * B * C * HW * 4                        # x/out blocks, double buffered
                  + 2 * 2 * C * 9 * C * patch_itemsize          # both weights
                  + 2 * C * 128 * 4                             # padded params tile
                  + 2 * 9 * C * B * HW * patch_itemsize         # im2col slabs
                  + 3 * C * B * HW * 4)                         # f32 intermediates
    vmem_limit = int(min(64 << 20, max(32 << 20, 2 * step_bytes)))

    kernel = functools.partial(_residual_block_kernel, H=H, W=W, B=B, mm_dtype=matmul_dtype)

    out = pl.pallas_call(
        kernel,
        out_shape=jax.ShapeDtypeStruct((N, C, HW), jnp.float32),
        grid_spec=pltpu.PrefetchScalarGridSpec(
            num_scalar_prefetch=0,
            grid=(grid_len,),
            in_specs=[
                pl.BlockSpec((B, C, HW), lambda n: (n, 0, 0)),     # x (lane-dense)
                pl.BlockSpec((C, 9 * C), lambda n: (0, 0)),        # w1 (resident, no re-DMA)
                pl.BlockSpec((C, 9 * C), lambda n: (0, 0)),        # w2 (resident, no re-DMA)
                pl.BlockSpec((C, 4), lambda n: (0, 0)),            # packed gamma/beta x2
            ],
            out_specs=pl.BlockSpec((B, C, HW), lambda n: (n, 0, 0)),
        ),
        compiler_params=pltpu.CompilerParams(
            dimension_semantics=("parallel",),
            vmem_limit_bytes=vmem_limit),
    )(x, w1m, w2m, params)

    return out.reshape(N, C, H, W)


def _reference(x, w1, g1, b1, w2, g2, b2):
    """Pure-JAX reference matching PyTorch (training-mode InstanceNorm uses instance stats)."""
    def conv(y, w):
        return jax.lax.conv_general_dilated(
            y, w, window_strides=(1, 1), padding=((1, 1), (1, 1)),
            dimension_numbers=("NCHW", "OIHW", "NCHW"))

    def inorm(y, g, b):
        mean = jnp.mean(y, axis=(2, 3), keepdims=True)
        var = jnp.mean((y - mean) ** 2, axis=(2, 3), keepdims=True)
        y_hat = (y - mean) / jnp.sqrt(var + EPS)
        return y_hat * g.reshape(1, -1, 1, 1) + b.reshape(1, -1, 1, 1)

    h = conv(x, w1)
    h = inorm(h, g1, b1)
    h = jnp.maximum(h, 0.0)
    h = conv(h, w2)
    h = inorm(h, g2, b2)
    return x + h


if __name__ == "__main__":
    # N=4 so the batched path (B=2 samples per grid step, grid length 2) is exercised.
    N, C, H, W = 4, 8, 16, 16           # dim_in == dim_out (required by the residual add)
    key = jax.random.PRNGKey(0)
    kx, kw1, kw2, kg1, kb1, kg2, kb2 = jax.random.split(key, 7)

    x = jax.random.normal(kx, (N, C, H, W), jnp.float32)
    # deterministic synthetic parameters (conv: no bias; InstanceNorm affine params)
    w1 = jax.random.normal(kw1, (C, C, 3, 3), jnp.float32) * 0.1
    w2 = jax.random.normal(kw2, (C, C, 3, 3), jnp.float32) * 0.1
    g1 = 1.0 + 0.1 * jax.random.normal(kg1, (C,), jnp.float32)
    b1 = 0.1 * jax.random.normal(kb1, (C,), jnp.float32)
    g2 = 1.0 + 0.1 * jax.random.normal(kg2, (C,), jnp.float32)
    b2 = 0.1 * jax.random.normal(kb2, (C,), jnp.float32)

    ref = _reference(x, w1, g1, b1, w2, g2, b2)

    # f32 matmul operands: exact-parity path (default).
    out = residual_block(x, w1, g1, b1, w2, g2, b2)
    out = jax.block_until_ready(out)
    assert out.shape == (N, C, H, W)
    assert jnp.allclose(out, ref, atol=5e-4, rtol=5e-4), \
        f"f32 path: max abs err {jnp.max(jnp.abs(out - ref))}"

    # bf16 matmul operands (f32 accumulation / norms): the MXU-friendly production setting.
    out_bf16 = residual_block(x, w1, g1, b1, w2, g2, b2, matmul_dtype=jnp.bfloat16)
    out_bf16 = jax.block_until_ready(out_bf16)
    assert jnp.allclose(out_bf16, ref, atol=5e-2, rtol=5e-2), \
        f"bf16 path: max abs err {jnp.max(jnp.abs(out_bf16 - ref))}"

    print("KERNEL_OK")
</pallas_src>

<mosaic_0001>
module attributes {stable_mosaic.version = 11 : i64} {
  func.func @_residual_block_kernel(%arg0: i32, %arg1: memref<2x8x256xf32, #tpu.memory_space<vmem>>, %arg2: memref<8x72xf32, #tpu.memory_space<vmem>>, %arg3: memref<8x72xf32, #tpu.memory_space<vmem>>, %arg4: memref<8x4xf32, #tpu.memory_space<vmem>>, %arg5: memref<2x8x256xf32, #tpu.memory_space<vmem>>) attributes {dimension_semantics = [#tpu.dimension_semantics<parallel>], iteration_bounds = array<i64: 2>, scalar_prefetch = 0 : i64, scratch_operands = 0 : i64, tpu.core_type = #tpu.core_type<tc>, window_params = [{transform_indices = @transform_0, window_bounds = array<i64: 2, 8, 256>}, {pipeline_mode = #tpu.pipeline_mode<synchronous>, transform_indices = @transform_1, window_bounds = array<i64: 8, 72>}, {pipeline_mode = #tpu.pipeline_mode<synchronous>, transform_indices = @transform_2, window_bounds = array<i64: 8, 72>}, {pipeline_mode = #tpu.pipeline_mode<synchronous>, transform_indices = @transform_3, window_bounds = array<i64: 8, 4>}, {transform_indices = @transform_4, window_bounds = array<i64: 2, 8, 256>}]} {
    %0 = tpu.iota {dimensions = array<i32: 1>} : vector<1x256xi32>
    %c16_i32 = arith.constant 16 : i32
    %c0_i32 = arith.constant 0 : i32
    %1 = arith.cmpi eq, %c16_i32, %c0_i32 : i32
    %c1_i32 = arith.constant 1 : i32
    %2 = arith.select %1, %c1_i32, %c16_i32 : i32
    %3 = vector.broadcast %2 : i32 to vector<1x256xi32>
    %4 = arith.remsi %0, %3 : vector<1x256xi32>
    %c0_i32_0 = arith.constant 0 : i32
    %5 = vector.broadcast %c0_i32_0 : i32 to vector<1x256xi32>
    %6 = arith.cmpi ne, %4, %5 : vector<1x256xi32>
    %c0_i32_1 = arith.constant 0 : i32
    %7 = vector.broadcast %c0_i32_1 : i32 to vector<1x256xi32>
    %8 = arith.cmpi slt, %4, %7 : vector<1x256xi32>
    %c0_i32_2 = arith.constant 0 : i32
    %9 = arith.cmpi slt, %2, %c0_i32_2 : i32
    %10 = vector.broadcast %9 : i1 to vector<1x256xi1>
    %11 = vector.broadcast %10 : vector<1x256xi1> to vector<1x256xi1>
    %12 = arith.xori %8, %11 : vector<1x256xi1>
    %13 = arith.andi %12, %6 : vector<1x256xi1>
    %14 = vector.broadcast %2 : i32 to vector<1x256xi32>
    %15 = arith.addi %4, %14 : vector<1x256xi32>
    %16 = arith.select %13, %15, %4 : vector<1x256xi1>, vector<1x256xi32>
    %c1_i32_3 = arith.constant 1 : i32
    %17 = vector.broadcast %c1_i32_3 : i32 to vector<1x256xi32>
    %18 = arith.cmpi sge, %16, %17 : vector<1x256xi32>
    %c14_i32 = arith.constant 14 : i32
    %19 = vector.broadcast %c14_i32 : i32 to vector<1x256xi32>
    %20 = arith.cmpi sle, %16, %19 : vector<1x256xi32>
    %cst = arith.constant 0.000000e+00 : f32
    %21 = vector.broadcast %cst : f32 to vector<8x17xf32>
    %c0 = arith.constant 0 : index
    %c0_4 = arith.constant 0 : index
    %22 = vector.load %arg4[%c0, %c0_4] : memref<8x4xf32, #tpu.memory_space<vmem>>, vector<8x1xf32>
    %c0_5 = arith.constant 0 : index
    %c1 = arith.constant 1 : index
    %23 = vector.load %arg4[%c0_5, %c1] : memref<8x4xf32, #tpu.memory_space<vmem>>, vector<8x1xf32>
    %c0_6 = arith.constant 0 : index
    %c2 = arith.constant 2 : index
    %24 = vector.load %arg4[%c0_6, %c2] : memref<8x4xf32, #tpu.memory_space<vmem>>, vector<8x1xf32>
    %c0_7 = arith.constant 0 : index
    %c3 = arith.constant 3 : index
    %25 = vector.load %arg4[%c0_7, %c3] : memref<8x4xf32, #tpu.memory_space<vmem>>, vector<8x1xf32>
    %c0_8 = arith.constant 0 : index
    %c0_9 = arith.constant 0 : index
    %c0_10 = arith.constant 0 : index
    %26 = vector.load %arg1[%c0_8, %c0_9, %c0_10] : memref<2x8x256xf32, #tpu.memory_space<vmem>>, vector<1x8x256xf32>
    %27 = vector.shape_cast %26 : vector<1x8x256xf32> to vector<8x256xf32>
    %28 = tpu.concatenate %21, %27, %21 in 1 : vector<8x17xf32>, vector<8x256xf32>, vector<8x17xf32> -> vector<8x290xf32>
    %29 = vector.extract_strided_slice %28 {offsets = [0, 0], sizes = [8, 256], strides = [1, 1]} : vector<8x290xf32> to vector<8x256xf32>
    %c0_i32_11 = arith.constant 0 : i32
    %30 = arith.sitofp %c0_i32_11 : i32 to f32
    %31 = vector.shape_cast %18 : vector<1x256xi1> to vector<1x256xi1>
    %32 = vector.broadcast %31 : vector<1x256xi1> to vector<8x256xi1>
    %33 = vector.broadcast %30 : f32 to vector<8x256xf32>
    %34 = arith.select %32, %29, %33 : vector<8x256xi1>, vector<8x256xf32>
    %35 = vector.extract_strided_slice %28 {offsets = [0, 1], sizes = [8, 256], strides = [1, 1]} : vector<8x290xf32> to vector<8x256xf32>
    %36 = vector.extract_strided_slice %28 {offsets = [0, 2], sizes = [8, 256], strides = [1, 1]} : vector<8x290xf32> to vector<8x256xf32>
    %c0_i32_12 = arith.constant 0 : i32
    %37 = arith.sitofp %c0_i32_12 : i32 to f32
    %38 = vector.shape_cast %20 : vector<1x256xi1> to vector<1x256xi1>
    %39 = vector.broadcast %38 : vector<1x256xi1> to vector<8x256xi1>
    %40 = vector.broadcast %37 : f32 to vector<8x256xf32>
    %41 = arith.select %39, %36, %40 : vector<8x256xi1>, vector<8x256xf32>
    %42 = vector.extract_strided_slice %28 {offsets = [0, 16], sizes = [8, 256], strides = [1, 1]} : vector<8x290xf32> to vector<8x256xf32>
    %c0_i32_13 = arith.constant 0 : i32
    %43 = arith.sitofp %c0_i32_13 : i32 to f32
    %44 = vector.shape_cast %18 : vector<1x256xi1> to vector<1x256xi1>
    %45 = vector.broadcast %44 : vector<1x256xi1> to vector<8x256xi1>
    %46 = vector.broadcast %43 : f32 to vector<8x256xf32>
    %47 = arith.select %45, %42, %46 : vector<8x256xi1>, vector<8x256xf32>
    %48 = vector.extract_strided_slice %28 {offsets = [0, 17], sizes = [8, 256], strides = [1, 1]} : vector<8x290xf32> to vector<8x256xf32>
    %49 = vector.extract_strided_slice %28 {offsets = [0, 18], sizes = [8, 256], strides = [1, 1]} : vector<8x290xf32> to vector<8x256xf32>
    %c0_i32_14 = arith.constant 0 : i32
    %50 = arith.sitofp %c0_i32_14 : i32 to f32
    %51 = vector.shape_cast %20 : vector<1x256xi1> to vector<1x256xi1>
    %52 = vector.broadcast %51 : vector<1x256xi1> to vector<8x256xi1>
    %53 = vector.broadcast %50 : f32 to vector<8x256xf32>
    %54 = arith.select %52, %49, %53 : vector<8x256xi1>, vector<8x256xf32>
    %55 = vector.extract_strided_slice %28 {offsets = [0, 32], sizes = [8, 256], strides = [1, 1]} : vector<8x290xf32> to vector<8x256xf32>
    %c0_i32_15 = arith.constant 0 : i32
    %56 = arith.sitofp %c0_i32_15 : i32 to f32
    %57 = vector.shape_cast %18 : vector<1x256xi1> to vector<1x256xi1>
    %58 = vector.broadcast %57 : vector<1x256xi1> to vector<8x256xi1>
    %59 = vector.broadcast %56 : f32 to vector<8x256xf32>
    %60 = arith.select %58, %55, %59 : vector<8x256xi1>, vector<8x256xf32>
    %61 = vector.extract_strided_slice %28 {offsets = [0, 33], sizes = [8, 256], strides = [1, 1]} : vector<8x290xf32> to vector<8x256xf32>
    %62 = vector.extract_strided_slice %28 {offsets = [0, 34], sizes = [8, 256], strides = [1, 1]} : vector<8x290xf32> to vector<8x256xf32>
    %c0_i32_16 = arith.constant 0 : i32
    %63 = arith.sitofp %c0_i32_16 : i32 to f32
    %64 = vector.shape_cast %20 : vector<1x256xi1> to vector<1x256xi1>
    %65 = vector.broadcast %64 : vector<1x256xi1> to vector<8x256xi1>
    %66 = vector.broadcast %63 : f32 to vector<8x256xf32>
    %67 = arith.select %65, %62, %66 : vector<8x256xi1>, vector<8x256xf32>
    %68 = tpu.concatenate %34, %35, %41, %47, %48, %54, %60, %61, %67 in 0 : vector<8x256xf32>, vector<8x256xf32>, vector<8x256xf32>, vector<8x256xf32>, vector<8x256xf32>, vector<8x256xf32>, vector<8x256xf32>, vector<8x256xf32>, vector<8x256xf32> -> vector<72x256xf32>
    %c1_17 = arith.constant 1 : index
    %c0_18 = arith.constant 0 : index
    %c0_19 = arith.constant 0 : index
    %69 = vector.load %arg1[%c1_17, %c0_18, %c0_19] : memref<2x8x256xf32, #tpu.memory_space<vmem>>, vector<1x8x256xf32>
    %70 = vector.shape_cast %69 : vector<1x8x256xf32> to vector<8x256xf32>
    %71 = tpu.concatenate %21, %70, %21 in 1 : vector<8x17xf32>, vector<8x256xf32>, vector<8x17xf32> -> vector<8x290xf32>
    %72 = vector.extract_strided_slice %71 {offsets = [0, 0], sizes = [8, 256], strides = [1, 1]} : vector<8x290xf32> to vector<8x256xf32>
    %c0_i32_20 = arith.constant 0 : i32
    %73 = arith.sitofp %c0_i32_20 : i32 to f32
    %74 = vector.shape_cast %18 : vector<1x256xi1> to vector<1x256xi1>
    %75 = vector.broadcast %74 : vector<1x256xi1> to vector<8x256xi1>
    %76 = vector.broadcast %73 : f32 to vector<8x256xf32>
    %77 = arith.select %75, %72, %76 : vector<8x256xi1>, vector<8x256xf32>
    %78 = vector.extract_strided_slice %71 {offsets = [0, 1], sizes = [8, 256], strides = [1, 1]} : vector<8x290xf32> to vector<8x256xf32>
    %79 = vector.extract_strided_slice %71 {offsets = [0, 2], sizes = [8, 256], strides = [1, 1]} : vector<8x290xf32> to vector<8x256xf32>
    %c0_i32_21 = arith.constant 0 : i32
    %80 = arith.sitofp %c0_i32_21 : i32 to f32
    %81 = vector.shape_cast %20 : vector<1x256xi1> to vector<1x256xi1>
    %82 = vector.broadcast %81 : vector<1x256xi1> to vector<8x256xi1>
    %83 = vector.broadcast %80 : f32 to vector<8x256xf32>
    %84 = arith.select %82, %79, %83 : vector<8x256xi1>, vector<8x256xf32>
    %85 = vector.extract_strided_slice %71 {offsets = [0, 16], sizes = [8, 256], strides = [1, 1]} : vector<8x290xf32> to vector<8x256xf32>
    %c0_i32_22 = arith.constant 0 : i32
    %86 = arith.sitofp %c0_i32_22 : i32 to f32
    %87 = vector.shape_cast %18 : vector<1x256xi1> to vector<1x256xi1>
    %88 = vector.broadcast %87 : vector<1x256xi1> to vector<8x256xi1>
    %89 = vector.broadcast %86 : f32 to vector<8x256xf32>
    %90 = arith.select %88, %85, %89 : vector<8x256xi1>, vector<8x256xf32>
    %91 = vector.extract_strided_slice %71 {offsets = [0, 17], sizes = [8, 256], strides = [1, 1]} : vector<8x290xf32> to vector<8x256xf32>
    %92 = vector.extract_strided_slice %71 {offsets = [0, 18], sizes = [8, 256], strides = [1, 1]} : vector<8x290xf32> to vector<8x256xf32>
    %c0_i32_23 = arith.constant 0 : i32
    %93 = arith.sitofp %c0_i32_23 : i32 to f32
    %94 = vector.shape_cast %20 : vector<1x256xi1> to vector<1x256xi1>
    %95 = vector.broadcast %94 : vector<1x256xi1> to vector<8x256xi1>
    %96 = vector.broadcast %93 : f32 to vector<8x256xf32>
    %97 = arith.select %95, %92, %96 : vector<8x256xi1>, vector<8x256xf32>
    %98 = vector.extract_strided_slice %71 {offsets = [0, 32], sizes = [8, 256], strides = [1, 1]} : vector<8x290xf32> to vector<8x256xf32>
    %c0_i32_24 = arith.constant 0 : i32
    %99 = arith.sitofp %c0_i32_24 : i32 to f32
    %100 = vector.shape_cast %18 : vector<1x256xi1> to vector<1x256xi1>
    %101 = vector.broadcast %100 : vector<1x256xi1> to vector<8x256xi1>
    %102 = vector.broadcast %99 : f32 to vector<8x256xf32>
    %103 = arith.select %101, %98, %102 : vector<8x256xi1>, vector<8x256xf32>
    %104 = vector.extract_strided_slice %71 {offsets = [0, 33], sizes = [8, 256], strides = [1, 1]} : vector<8x290xf32> to vector<8x256xf32>
    %105 = vector.extract_strided_slice %71 {offsets = [0, 34], sizes = [8, 256], strides = [1, 1]} : vector<8x290xf32> to vector<8x256xf32>
    %c0_i32_25 = arith.constant 0 : i32
    %106 = arith.sitofp %c0_i32_25 : i32 to f32
    %107 = vector.shape_cast %20 : vector<1x256xi1> to vector<1x256xi1>
    %108 = vector.broadcast %107 : vector<1x256xi1> to vector<8x256xi1>
    %109 = vector.broadcast %106 : f32 to vector<8x256xf32>
    %110 = arith.select %108, %105, %109 : vector<8x256xi1>, vector<8x256xf32>
    %111 = tpu.concatenate %77, %78, %84, %90, %91, %97, %103, %104, %110 in 0 : vector<8x256xf32>, vector<8x256xf32>, vector<8x256xf32>, vector<8x256xf32>, vector<8x256xf32>, vector<8x256xf32>, vector<8x256xf32>, vector<8x256xf32>, vector<8x256xf32> -> vector<72x256xf32>
    %112 = tpu.concatenate %68, %111 in 1 : vector<72x256xf32>, vector<72x256xf32> -> vector<72x512xf32>
    %c0_26 = arith.constant 0 : index
    %c0_27 = arith.constant 0 : index
    %113 = vector.load %arg2[%c0_26, %c0_27] : memref<8x72xf32, #tpu.memory_space<vmem>>, vector<8x72xf32>
    %cst_28 = arith.constant dense<0.000000e+00> : vector<8x512xf32>
    %114 = tpu.matmul %113, %112, %cst_28 {dimension_numbers = #tpu.dot_dimension_numbers<[1], [0], [0], [1], [0, 0, 1, 1], [], []>} : vector<8x72xf32>, vector<72x512xf32>, vector<8x512xf32> -> vector<8x512xf32>
    %115 = vector.extract_strided_slice %114 {offsets = [0, 0], sizes = [8, 256], strides = [1, 1]} : vector<8x512xf32> to vector<8x256xf32>
    %cst_29 = arith.constant dense<0.000000e+00> : vector<8xf32>
    %116 = vector.multi_reduction <add>, %115, %cst_29 [1] : vector<8x256xf32> to vector<8xf32>
    %117 = vector.shape_cast %116 : vector<8xf32> to vector<8x1xf32>
    %cst_30 = arith.constant 2.560000e+02 : f32
    %118 = vector.broadcast %cst_30 : f32 to vector<8x1xf32>
    %119 = arith.divf %117, %118 : vector<8x1xf32>
    %120 = vector.broadcast %119 : vector<8x1xf32> to vector<8x256xf32>
    %121 = arith.subf %115, %120 : vector<8x256xf32>
    %122 = arith.mulf %121, %121 : vector<8x256xf32>
    %cst_31 = arith.constant dense<0.000000e+00> : vector<8xf32>
    %123 = vector.multi_reduction <add>, %122, %cst_31 [1] : vector<8x256xf32> to vector<8xf32>
    %124 = vector.shape_cast %123 : vector<8xf32> to vector<8x1xf32>
    %cst_32 = arith.constant 2.560000e+02 : f32
    %125 = vector.broadcast %cst_32 : f32 to vector<8x1xf32>
    %126 = arith.divf %124, %125 : vector<8x1xf32>
    %cst_33 = arith.constant 9.99999974E-6 : f32
    %127 = vector.broadcast %cst_33 : f32 to vector<8x1xf32>
    %128 = arith.addf %126, %127 : vector<8x1xf32>
    %129 = math.rsqrt %128 : vector<8x1xf32>
    %130 = arith.mulf %22, %129 : vector<8x1xf32>
    %131 = arith.mulf %119, %130 : vector<8x1xf32>
    %132 = arith.subf %23, %131 : vector<8x1xf32>
    %133 = vector.broadcast %130 : vector<8x1xf32> to vector<8x256xf32>
    %134 = arith.mulf %115, %133 : vector<8x256xf32>
    %135 = vector.broadcast %132 : vector<8x1xf32> to vector<8x256xf32>
    %136 = arith.addf %134, %135 : vector<8x256xf32>
    %cst_34 = arith.constant 0.000000e+00 : f32
    %137 = vector.broadcast %cst_34 : f32 to vector<8x256xf32>
    %138 = arith.maximumf %136, %137 : vector<8x256xf32>
    %139 = tpu.concatenate %21, %138, %21 in 1 : vector<8x17xf32>, vector<8x256xf32>, vector<8x17xf32> -> vector<8x290xf32>
    %140 = vector.extract_strided_slice %139 {offsets = [0, 0], sizes = [8, 256], strides = [1, 1]} : vector<8x290xf32> to vector<8x256xf32>
    %c0_i32_35 = arith.constant 0 : i32
    %141 = arith.sitofp %c0_i32_35 : i32 to f32
    %142 = vector.shape_cast %18 : vector<1x256xi1> to vector<1x256xi1>
    %143 = vector.broadcast %142 : vector<1x256xi1> to vector<8x256xi1>
    %144 = vector.broadcast %141 : f32 to vector<8x256xf32>
    %145 = arith.select %143, %140, %144 : vector<8x256xi1>, vector<8x256xf32>
    %146 = vector.extract_strided_slice %139 {offsets = [0, 1], sizes = [8, 256], strides = [1, 1]} : vector<8x290xf32> to vector<8x256xf32>
    %147 = vector.extract_strided_slice %139 {offsets = [0, 2], sizes = [8, 256], strides = [1, 1]} : vector<8x290xf32> to vector<8x256xf32>
    %c0_i32_36 = arith.constant 0 : i32
    %148 = arith.sitofp %c0_i32_36 : i32 to f32
    %149 = vector.shape_cast %20 : vector<1x256xi1> to vector<1x256xi1>
    %150 = vector.broadcast %149 : vector<1x256xi1> to vector<8x256xi1>
    %151 = vector.broadcast %148 : f32 to vector<8x256xf32>
    %152 = arith.select %150, %147, %151 : vector<8x256xi1>, vector<8x256xf32>
    %153 = vector.extract_strided_slice %139 {offsets = [0, 16], sizes = [8, 256], strides = [1, 1]} : vector<8x290xf32> to vector<8x256xf32>
    %c0_i32_37 = arith.constant 0 : i32
    %154 = arith.sitofp %c0_i32_37 : i32 to f32
    %155 = vector.shape_cast %18 : vector<1x256xi1> to vector<1x256xi1>
    %156 = vector.broadcast %155 : vector<1x256xi1> to vector<8x256xi1>
    %157 = vector.broadcast %154 : f32 to vector<8x256xf32>
    %158 = arith.select %156, %153, %157 : vector<8x256xi1>, vector<8x256xf32>
    %159 = vector.extract_strided_slice %139 {offsets = [0, 17], sizes = [8, 256], strides = [1, 1]} : vector<8x290xf32> to vector<8x256xf32>
    %160 = vector.extract_strided_slice %139 {offsets = [0, 18], sizes = [8, 256], strides = [1, 1]} : vector<8x290xf32> to vector<8x256xf32>
    %c0_i32_38 = arith.constant 0 : i32
    %161 = arith.sitofp %c0_i32_38 : i32 to f32
    %162 = vector.shape_cast %20 : vector<1x256xi1> to vector<1x256xi1>
    %163 = vector.broadcast %162 : vector<1x256xi1> to vector<8x256xi1>
    %164 = vector.broadcast %161 : f32 to vector<8x256xf32>
    %165 = arith.select %163, %160, %164 : vector<8x256xi1>, vector<8x256xf32>
    %166 = vector.extract_strided_slice %139 {offsets = [0, 32], sizes = [8, 256], strides = [1, 1]} : vector<8x290xf32> to vector<8x256xf32>
    %c0_i32_39 = arith.constant 0 : i32
    %167 = arith.sitofp %c0_i32_39 : i32 to f32
    %168 = vector.shape_cast %18 : vector<1x256xi1> to vector<1x256xi1>
    %169 = vector.broadcast %168 : vector<1x256xi1> to vector<8x256xi1>
    %170 = vector.broadcast %167 : f32 to vector<8x256xf32>
    %171 = arith.select %169, %166, %170 : vector<8x256xi1>, vector<8x256xf32>
    %172 = vector.extract_strided_slice %139 {offsets = [0, 33], sizes = [8, 256], strides = [1, 1]} : vector<8x290xf32> to vector<8x256xf32>
    %173 = vector.extract_strided_slice %139 {offsets = [0, 34], sizes = [8, 256], strides = [1, 1]} : vector<8x290xf32> to vector<8x256xf32>
    %c0_i32_40 = arith.constant 0 : i32
    %174 = arith.sitofp %c0_i32_40 : i32 to f32
    %175 = vector.shape_cast %20 : vector<1x256xi1> to vector<1x256xi1>
    %176 = vector.broadcast %175 : vector<1x256xi1> to vector<8x256xi1>
    %177 = vector.broadcast %174 : f32 to vector<8x256xf32>
    %178 = arith.select %176, %173, %177 : vector<8x256xi1>, vector<8x256xf32>
    %179 = tpu.concatenate %145, %146, %152, %158, %159, %165, %171, %172, %178 in 0 : vector<8x256xf32>, vector<8x256xf32>, vector<8x256xf32>, vector<8x256xf32>, vector<8x256xf32>, vector<8x256xf32>, vector<8x256xf32>, vector<8x256xf32>, vector<8x256xf32> -> vector<72x256xf32>
    %180 = vector.extract_strided_slice %114 {offsets = [0, 256], sizes = [8, 256], strides = [1, 1]} : vector<8x512xf32> to vector<8x256xf32>
    %cst_41 = arith.constant dense<0.000000e+00> : vector<8xf32>
    %181 = vector.multi_reduction <add>, %180, %cst_41 [1] : vector<8x256xf32> to vector<8xf32>
    %182 = vector.shape_cast %181 : vector<8xf32> to vector<8x1xf32>
    %cst_42 = arith.constant 2.560000e+02 : f32
    %183 = vector.broadcast %cst_42 : f32 to vector<8x1xf32>
    %184 = arith.divf %182, %183 : vector<8x1xf32>
    %185 = vector.broadcast %184 : vector<8x1xf32> to vector<8x256xf32>
    %186 = arith.subf %180, %185 : vector<8x256xf32>
    %187 = arith.mulf %186, %186 : vector<8x256xf32>
    %cst_43 = arith.constant dense<0.000000e+00> : vector<8xf32>
    %188 = vector.multi_reduction <add>, %187, %cst_43 [1] : vector<8x256xf32> to vector<8xf32>
    %189 = vector.shape_cast %188 : vector<8xf32> to vector<8x1xf32>
    %cst_44 = arith.constant 2.560000e+02 : f32
    %190 = vector.broadcast %cst_44 : f32 to vector<8x1xf32>
    %191 = arith.divf %189, %190 : vector<8x1xf32>
    %cst_45 = arith.constant 9.99999974E-6 : f32
    %192 = vector.broadcast %cst_45 : f32 to vector<8x1xf32>
    %193 = arith.addf %191, %192 : vector<8x1xf32>
    %194 = math.rsqrt %193 : vector<8x1xf32>
    %195 = arith.mulf %22, %194 : vector<8x1xf32>
    %196 = arith.mulf %184, %195 : vector<8x1xf32>
    %197 = arith.subf %23, %196 : vector<8x1xf32>
    %198 = vector.broadcast %195 : vector<8x1xf32> to vector<8x256xf32>
    %199 = arith.mulf %180, %198 : vector<8x256xf32>
    %200 = vector.broadcast %197 : vector<8x1xf32> to vector<8x256xf32>
    %201 = arith.addf %199, %200 : vector<8x256xf32>
    %cst_46 = arith.constant 0.000000e+00 : f32
    %202 = vector.broadcast %cst_46 : f32 to vector<8x256xf32>
    %203 = arith.maximumf %201, %202 : vector<8x256xf32>
    %204 = tpu.concatenate %21, %203, %21 in 1 : vector<8x17xf32>, vector<8x256xf32>, vector<8x17xf32> -> vector<8x290xf32>
    %205 = vector.extract_strided_slice %204 {offsets = [0, 0], sizes = [8, 256], strides = [1, 1]} : vector<8x290xf32> to vector<8x256xf32>
    %c0_i32_47 = arith.constant 0 : i32
    %206 = arith.sitofp %c0_i32_47 : i32 to f32
    %207 = vector.shape_cast %18 : vector<1x256xi1> to vector<1x256xi1>
    %208 = vector.broadcast %207 : vector<1x256xi1> to vector<8x256xi1>
    %209 = vector.broadcast %206 : f32 to vector<8x256xf32>
    %210 = arith.select %208, %205, %209 : vector<8x256xi1>, vector<8x256xf32>
    %211 = vector.extract_strided_slice %204 {offsets = [0, 1], sizes = [8, 256], strides = [1, 1]} : vector<8x290xf32> to vector<8x256xf32>
    %212 = vector.extract_strided_slice %204 {offsets = [0, 2], sizes = [8, 256], strides = [1, 1]} : vector<8x290xf32> to vector<8x256xf32>
    %c0_i32_48 = arith.constant 0 : i32
    %213 = arith.sitofp %c0_i32_48 : i32 to f32
    %214 = vector.shape_cast %20 : vector<1x256xi1> to vector<1x256xi1>
    %215 = vector.broadcast %214 : vector<1x256xi1> to vector<8x256xi1>
    %216 = vector.broadcast %213 : f32 to vector<8x256xf32>
    %217 = arith.select %215, %212, %216 : vector<8x256xi1>, vector<8x256xf32>
    %218 = vector.extract_strided_slice %204 {offsets = [0, 16], sizes = [8, 256], strides = [1, 1]} : vector<8x290xf32> to vector<8x256xf32>
    %c0_i32_49 = arith.constant 0 : i32
    %219 = arith.sitofp %c0_i32_49 : i32 to f32
    %220 = vector.shape_cast %18 : vector<1x256xi1> to vector<1x256xi1>
    %221 = vector.broadcast %220 : vector<1x256xi1> to vector<8x256xi1>
    %222 = vector.broadcast %219 : f32 to vector<8x256xf32>
    %223 = arith.select %221, %218, %222 : vector<8x256xi1>, vector<8x256xf32>
    %224 = vector.extract_strided_slice %204 {offsets = [0, 17], sizes = [8, 256], strides = [1, 1]} : vector<8x290xf32> to vector<8x256xf32>
    %225 = vector.extract_strided_slice %204 {offsets = [0, 18], sizes = [8, 256], strides = [1, 1]} : vector<8x290xf32> to vector<8x256xf32>
    %c0_i32_50 = arith.constant 0 : i32
    %226 = arith.sitofp %c0_i32_50 : i32 to f32
    %227 = vector.shape_cast %20 : vector<1x256xi1> to vector<1x256xi1>
    %228 = vector.broadcast %227 : vector<1x256xi1> to vector<8x256xi1>
    %229 = vector.broadcast %226 : f32 to vector<8x256xf32>
    %230 = arith.select %228, %225, %229 : vector<8x256xi1>, vector<8x256xf32>
    %231 = vector.extract_strided_slice %204 {offsets = [0, 32], sizes = [8, 256], strides = [1, 1]} : vector<8x290xf32> to vector<8x256xf32>
    %c0_i32_51 = arith.constant 0 : i32
    %232 = arith.sitofp %c0_i32_51 : i32 to f32
    %233 = vector.shape_cast %18 : vector<1x256xi1> to vector<1x256xi1>
    %234 = vector.broadcast %233 : vector<1x256xi1> to vector<8x256xi1>
    %235 = vector.broadcast %232 : f32 to vector<8x256xf32>
    %236 = arith.select %234, %231, %235 : vector<8x256xi1>, vector<8x256xf32>
    %237 = vector.extract_strided_slice %204 {offsets = [0, 33], sizes = [8, 256], strides = [1, 1]} : vector<8x290xf32> to vector<8x256xf32>
    %238 = vector.extract_strided_slice %204 {offsets = [0, 34], sizes = [8, 256], strides = [1, 1]} : vector<8x290xf32> to vector<8x256xf32>
    %c0_i32_52 = arith.constant 0 : i32
    %239 = arith.sitofp %c0_i32_52 : i32 to f32
    %240 = vector.shape_cast %20 : vector<1x256xi1> to vector<1x256xi1>
    %241 = vector.broadcast %240 : vector<1x256xi1> to vector<8x256xi1>
    %242 = vector.broadcast %239 : f32 to vector<8x256xf32>
    %243 = arith.select %241, %238, %242 : vector<8x256xi1>, vector<8x256xf32>
    %244 = tpu.concatenate %210, %211, %217, %223, %224, %230, %236, %237, %243 in 0 : vector<8x256xf32>, vector<8x256xf32>, vector<8x256xf32>, vector<8x256xf32>, vector<8x256xf32>, vector<8x256xf32>, vector<8x256xf32>, vector<8x256xf32>, vector<8x256xf32> -> vector<72x256xf32>
    %245 = tpu.concatenate %179, %244 in 1 : vector<72x256xf32>, vector<72x256xf32> -> vector<72x512xf32>
    %c0_53 = arith.constant 0 : index
    %c0_54 = arith.constant 0 : index
    %246 = vector.load %arg3[%c0_53, %c0_54] : memref<8x72xf32, #tpu.memory_space<vmem>>, vector<8x72xf32>
    %cst_55 = arith.constant dense<0.000000e+00> : vector<8x512xf32>
    %247 = tpu.matmul %246, %245, %cst_55 {dimension_numbers = #tpu.dot_dimension_numbers<[1], [0], [0], [1], [0, 0, 1, 1], [], []>} : vector<8x72xf32>, vector<72x512xf32>, vector<8x512xf32> -> vector<8x512xf32>
    %248 = vector.extract_strided_slice %247 {offsets = [0, 0], sizes = [8, 256], strides = [1, 1]} : vector<8x512xf32> to vector<8x256xf32>
    %c0_56 = arith.constant 0 : index
    %c0_57 = arith.constant 0 : index
    %c0_58 = arith.constant 0 : index
    %249 = vector.load %arg1[%c0_56, %c0_57, %c0_58] : memref<2x8x256xf32, #tpu.memory_space<vmem>>, vector<1x8x256xf32>
    %250 = vector.shape_cast %249 : vector<1x8x256xf32> to vector<8x256xf32>
    %cst_59 = arith.constant dense<0.000000e+00> : vector<8xf32>
    %251 = vector.multi_reduction <add>, %248, %cst_59 [1] : vector<8x256xf32> to vector<8xf32>
    %252 = vector.shape_cast %251 : vector<8xf32> to vector<8x1xf32>
    %cst_60 = arith.constant 2.560000e+02 : f32
    %253 = vector.broadcast %cst_60 : f32 to vector<8x1xf32>
    %254 = arith.divf %252, %253 : vector<8x1xf32>
    %255 = vector.broadcast %254 : vector<8x1xf32> to vector<8x256xf32>
    %256 = arith.subf %248, %255 : vector<8x256xf32>
    %257 = arith.mulf %256, %256 : vector<8x256xf32>
    %cst_61 = arith.constant dense<0.000000e+00> : vector<8xf32>
    %258 = vector.multi_reduction <add>, %257, %cst_61 [1] : vector<8x256xf32> to vector<8xf32>
    %259 = vector.shape_cast %258 : vector<8xf32> to vector<8x1xf32>
    %cst_62 = arith.constant 2.560000e+02 : f32
    %260 = vector.broadcast %cst_62 : f32 to vector<8x1xf32>
    %261 = arith.divf %259, %260 : vector<8x1xf32>
    %cst_63 = arith.constant 9.99999974E-6 : f32
    %262 = vector.broadcast %cst_63 : f32 to vector<8x1xf32>
    %263 = arith.addf %261, %262 : vector<8x1xf32>
    %264 = math.rsqrt %263 : vector<8x1xf32>
    %265 = arith.mulf %24, %264 : vector<8x1xf32>
    %266 = arith.mulf %254, %265 : vector<8x1xf32>
    %267 = arith.subf %25, %266 : vector<8x1xf32>
    %268 = vector.broadcast %265 : vector<8x1xf32> to vector<8x256xf32>
    %269 = arith.mulf %248, %268 : vector<8x256xf32>
    %270 = vector.broadcast %267 : vector<8x1xf32> to vector<8x256xf32>
    %271 = arith.addf %269, %270 : vector<8x256xf32>
    %272 = arith.addf %250, %271 : vector<8x256xf32>
    %c0_64 = arith.constant 0 : index
    %c0_65 = arith.constant 0 : index
    %c0_66 = arith.constant 0 : index
    %273 = vector.load %arg5[%c0_64, %c0_65, %c0_66] : memref<2x8x256xf32, #tpu.memory_space<vmem>>, vector<1x8x256xf32>
    %274 = vector.shape_cast %273 : vector<1x8x256xf32> to vector<8x256xf32>
    %275 = vector.shape_cast %272 : vector<8x256xf32> to vector<1x8x256xf32>
    tpu.vector_store %arg5[%c0_64, %c0_65, %c0_66], %275 {strides = array<i32>} : memref<2x8x256xf32, #tpu.memory_space<vmem>>, vector<1x8x256xf32>,
    %276 = vector.extract_strided_slice %247 {offsets = [0, 256], sizes = [8, 256], strides = [1, 1]} : vector<8x512xf32> to vector<8x256xf32>
    %c1_67 = arith.constant 1 : index
    %c0_68 = arith.constant 0 : index
    %c0_69 = arith.constant 0 : index
    %277 = vector.load %arg1[%c1_67, %c0_68, %c0_69] : memref<2x8x256xf32, #tpu.memory_space<vmem>>, vector<1x8x256xf32>
    %278 = vector.shape_cast %277 : vector<1x8x256xf32> to vector<8x256xf32>
    %cst_70 = arith.constant dense<0.000000e+00> : vector<8xf32>
    %279 = vector.multi_reduction <add>, %276, %cst_70 [1] : vector<8x256xf32> to vector<8xf32>
    %280 = vector.shape_cast %279 : vector<8xf32> to vector<8x1xf32>
    %cst_71 = arith.constant 2.560000e+02 : f32
    %281 = vector.broadcast %cst_71 : f32 to vector<8x1xf32>
    %282 = arith.divf %280, %281 : vector<8x1xf32>
    %283 = vector.broadcast %282 : vector<8x1xf32> to vector<8x256xf32>
    %284 = arith.subf %276, %283 : vector<8x256xf32>
    %285 = arith.mulf %284, %284 : vector<8x256xf32>
    %cst_72 = arith.constant dense<0.000000e+00> : vector<8xf32>
    %286 = vector.multi_reduction <add>, %285, %cst_72 [1] : vector<8x256xf32> to vector<8xf32>
    %287 = vector.shape_cast %286 : vector<8xf32> to vector<8x1xf32>
    %cst_73 = arith.constant 2.560000e+02 : f32
    %288 = vector.broadcast %cst_73 : f32 to vector<8x1xf32>
    %289 = arith.divf %287, %288 : vector<8x1xf32>
    %cst_74 = arith.constant 9.99999974E-6 : f32
    %290 = vector.broadcast %cst_74 : f32 to vector<8x1xf32>
    %291 = arith.addf %289, %290 : vector<8x1xf32>
    %292 = math.rsqrt %291 : vector<8x1xf32>
    %293 = arith.mulf %24, %292 : vector<8x1xf32>
    %294 = arith.mulf %282, %293 : vector<8x1xf32>
    %295 = arith.subf %25, %294 : vector<8x1xf32>
    %296 = vector.broadcast %293 : vector<8x1xf32> to vector<8x256xf32>
    %297 = arith.mulf %276, %296 : vector<8x256xf32>
    %298 = vector.broadcast %295 : vector<8x1xf32> to vector<8x256xf32>
    %299 = arith.addf %297, %298 : vector<8x256xf32>
    %300 = arith.addf %278, %299 : vector<8x256xf32>
    %c1_75 = arith.constant 1 : index
    %c0_76 = arith.constant 0 : index
    %c0_77 = arith.constant 0 : index
    %301 = vector.load %arg5[%c1_75, %c0_76, %c0_77] : memref<2x8x256xf32, #tpu.memory_space<vmem>>, vector<1x8x256xf32>
    %302 = vector.shape_cast %301 : vector<1x8x256xf32> to vector<8x256xf32>
    %303 = vector.shape_cast %300 : vector<8x256xf32> to vector<1x8x256xf32>
    tpu.vector_store %arg5[%c1_75, %c0_76, %c0_77], %303 {strides = array<i32>} : memref<2x8x256xf32, #tpu.memory_space<vmem>>, vector<1x8x256xf32>,
    return
  }
  func.func @transform_0(%arg0: i32) -> (i32, i32, i32) {
    %c0_i32 = arith.constant 0 : i32
    %c0_i32_0 = arith.constant 0 : i32
    %c0_i32_1 = arith.constant 0 : i32
    return %arg0, %c0_i32, %c0_i32_0 : i32, i32, i32
  }
  func.func @transform_1(%arg0: i32) -> (i32, i32) {
    %c0_i32 = arith.constant 0 : i32
    %c0_i32_0 = arith.constant 0 : i32
    %c0_i32_1 = arith.constant 0 : i32
    return %c0_i32, %c0_i32_0 : i32, i32
  }
  func.func @transform_2(%arg0: i32) -> (i32, i32) {
    %c0_i32 = arith.constant 0 : i32
    %c0_i32_0 = arith.constant 0 : i32
    %c0_i32_1 = arith.constant 0 : i32
    return %c0_i32, %c0_i32_0 : i32, i32
  }
  func.func @transform_3(%arg0: i32) -> (i32, i32) {
    %c0_i32 = arith.constant 0 : i32
    %c0_i32_0 = arith.constant 0 : i32
    %c0_i32_1 = arith.constant 0 : i32
    return %c0_i32, %c0_i32_0 : i32, i32
  }
  func.func @transform_4(%arg0: i32) -> (i32, i32, i32) {
    %c0_i32 = arith.constant 0 : i32
    %c0_i32_0 = arith.constant 0 : i32
    %c0_i32_1 = arith.constant 0 : i32
    return %arg0, %c0_i32, %c0_i32_0 : i32, i32, i32
  }
}

</mosaic_0001>

<llo_original>
// kernel: tpu_custom_call.1
$region0: #{tpu_custom_call.1}
  #allocation0 [shape = 'u32[]', space=smem, size = 0x4, offset = 0x4, fixed_abs, tag = 'smem constant byte address 0x4 - core index']
  #allocation1 [shape = 'u32[144,128]{1,0:T(1,128)}', space=vmem, size = 0x12000, scoped, tag = 'internal scratch']
  %s0 = inlined_call_operand.hbm [shape: f32[4,8,256], index: 0, kind: input, shape index: {}]
  %s1 = inlined_call_operand.vmem [shape: f32[8,72], index: 1, kind: input, shape index: {}]
  %s2 = inlined_call_operand.hbm [shape: f32[8,72], index: 2, kind: input, shape index: {}]
  %s3 = inlined_call_operand.vmem [shape: f32[8,4], index: 3, kind: input, shape index: {}]
  %s4 = inlined_call_operand.hbm [shape: f32[4,8,256], index: 4, kind: output, shape index: {}]
  %s5 = sld [smem:[#allocation0]]
  $region57: #{tpu_custom_call.1} parent=0
    _
  %s7 = ssub.s32 1, %s5
  %s8 = scalar_select 0, %s7, %s5
  $region1: #{tpu_custom_call.1} parent=0
    #allocation2 [shape = 'u8[32768]{0}', space=vmem, size = 0x8000, scoped, tag = 'input window, operand 0']
    #allocation3 [shape = 's32[2]{0}', space=sflag, size = 0x8, scoped, tag = 'scoped memory for tpu_custom_call.1']
    #allocation4 [shape = 's32[2]{0}', space=sflag, size = 0x8, scoped, tag = 'scoped memory for tpu_custom_call.1']
    #allocation5 [shape = 'u8[4096]{0}', space=vmem, size = 0x1000, scoped, tag = 'input window, operand 2, single buffered']
    #allocation6 [shape = 's32[1]{0}', space=sflag, size = 0x4, scoped, tag = 'scoped memory for tpu_custom_call.1']
    #allocation7 [shape = 'u8[32768]{0}', space=vmem, size = 0x8000, scoped, tag = 'output window, operand 0']
    %9 = vsyncpa [#allocation3], 0
    %s10 = scalar_lea.sflag [#allocation3], 1
    %11 = vsyncpa %s10, 0
    %12 = vsyncpa [#allocation6], 0
    %13 = vsyncpa [#allocation4], 0
    %s14 = scalar_lea.sflag [#allocation4], 1
    %15 = vsyncpa %s14, 0
    loop: start=0, step=1, limit=4
    $region2: #{tpu_custom_call.1} parent=1 // loop_pre_header
      _
    $region3: #{tpu_custom_call.1} parent=1 // loop_header
      %s17 = sphi 0, %s21
      %p18 = scmp.ge.s32.totalorder %s17, 4
      %s27 = sphi 0, %s29
      %s30 = sphi 0, %s27
      %s31 = sphi 0, %s30
      %s47 = sphi 0, %s31
      %s51 = sphi 0, %s51
      %s53 = sphi 0, %s51
      %s54 = sphi 0, %s53
      %s68 = sphi 0, %s54
      %s72 = sphi 0, %s72
      %s74 = sphi 0, %s72
      %s75 = sphi 0, %s74
      %s89 = sphi 0, %s75
      %s93 = sphi 0, %s93
      %s95 = sphi 0, %s93
      %s96 = sphi 0, %s95
      %s110 = sphi 0, %s96
      %s116 = sphi 0, %s118
      %s119 = sphi 0, %s116
      %s120 = sphi 0, %s119
      %s136 = sphi 0, %s120
    $region4: #{tpu_custom_call.1} parent=1 // loop_header_branch
      %20 = sbr.rel (%p18) target = $region8
    $region5: #{tpu_custom_call.1} parent=1 // loop_body
      %s22 = ssub.s32 %s17, 1
      %s23 = ssub.s32 %s17, 2
      %s24 = sadd.s32 %s17, 1
      %s25 = ssub.s32 %s17, %s24
      %p26 = scmp.eq.s32.totalorder %s25, 0
      %s28 = sadd.s32 %s27, 1
      %s29 = scalar_select %p26, %s27, %s28
      %p32 = pneg %p26
      %p33 = scmp.eq.s32.totalorder %s17, 1
      %p34 = por %p32, %p33
      %p35 = scmp.ne.s32.totalorder %s27, %s30
      %p36 = scmp.eq.s32.totalorder %s17, 0
      %p37 = por %p35, %p36
      %p38 = scmp.ne.s32.totalorder %s27, %s30
      %p39 = scmp.eq.s32.totalorder %s22, 1
      %p40 = por %p38, %p39
      %p41 = scmp.ne.s32.totalorder %s30, %s31
      %p42 = scmp.eq.s32.totalorder %s22, 0
      %p43 = por %p41, %p42
      %p44 = scmp.ne.s32.totalorder %s30, %s31
      %p45 = scmp.eq.s32.totalorder %s23, 1
      %p46 = por %p44, %p45
      %p48 = scmp.ne.s32.totalorder %s31, %s47
      %p49 = scmp.eq.s32.totalorder %s23, 0
      %p50 = por %p48, %p49
      %s52 = sadd.s32 %s51, 1
      %p55 = scmp.eq.s32.totalorder %s17, 1
      %p56 = scmp.ne.s32.totalorder %s51, %s53
      %p57 = scmp.eq.s32.totalorder %s17, 0
      %p58 = por %p56, %p57
      %p59 = scmp.ne.s32.totalorder %s51, %s53
      %p60 = scmp.eq.s32.totalorder %s22, 1
      %p61 = por %p59, %p60
      %p62 = scmp.ne.s32.totalorder %s53, %s54
      %p63 = scmp.eq.s32.totalorder %s22, 0
      %p64 = por %p62, %p63
      %p65 = scmp.ne.s32.totalorder %s53, %s54
      %p66 = scmp.eq.s32.totalorder %s23, 1
      %p67 = por %p65, %p66
      %p69 = scmp.ne.s32.totalorder %s54, %s68
      %p70 = scmp.eq.s32.totalorder %s23, 0
      %p71 = por %p69, %p70
      %s73 = sadd.s32 %s72, 1
      %p76 = scmp.eq.s32.totalorder %s17, 1
      %p77 = scmp.ne.s32.totalorder %s72, %s74
      %p78 = scmp.eq.s32.totalorder %s17, 0
      %p79 = por %p77, %p78
      %p80 = scmp.ne.s32.totalorder %s72, %s74
      %p81 = scmp.eq.s32.totalorder %s22, 1
      %p82 = por %p80, %p81
      %p83 = scmp.ne.s32.totalorder %s74, %s75
      %p84 = scmp.eq.s32.totalorder %s22, 0
      %p85 = por %p83, %p84
      %p86 = scmp.ne.s32.totalorder %s74, %s75
      %p87 = scmp.eq.s32.totalorder %s23, 1
      %p88 = por %p86, %p87
      %p90 = scmp.ne.s32.totalorder %s75, %s89
      %p91 = scmp.eq.s32.totalorder %s23, 0
      %p92 = por %p90, %p91
      %s94 = sadd.s32 %s93, 1
      %p97 = scmp.eq.s32.totalorder %s17, 1
      %p98 = scmp.ne.s32.totalorder %s93, %s95
      %p99 = scmp.eq.s32.totalorder %s17, 0
      %p100 = por %p98, %p99
      %p101 = scmp.ne.s32.totalorder %s93, %s95
      %p102 = scmp.eq.s32.totalorder %s22, 1
      %p103 = por %p101, %p102
      %p104 = scmp.ne.s32.totalorder %s95, %s96
      %p105 = scmp.eq.s32.totalorder %s22, 0
      %p106 = por %p104, %p105
      %p107 = scmp.ne.s32.totalorder %s95, %s96
      %p108 = scmp.eq.s32.totalorder %s23, 1
      %p109 = por %p107, %p108
      %p111 = scmp.ne.s32.totalorder %s96, %s110
      %p112 = scmp.eq.s32.totalorder %s23, 0
      %p113 = por %p111, %p112
      %s114 = ssub.s32 %s17, %s24
      %p115 = scmp.eq.s32.totalorder %s114, 0
      %s117 = sadd.s32 %s116, 1
      %s118 = scalar_select %p115, %s116, %s117
      %p121 = pneg %p115
      %p122 = scmp.eq.s32.totalorder %s17, 1
      %p123 = por %p121, %p122
      %p124 = scmp.ne.s32.totalorder %s116, %s119
      %p125 = scmp.eq.s32.totalorder %s17, 0
      %p126 = por %p124, %p125
      %p127 = scmp.ne.s32.totalorder %s116, %s119
      %p128 = scmp.eq.s32.totalorder %s22, 1
      %p129 = por %p127, %p128
      %p130 = scmp.ne.s32.totalorder %s119, %s120
      %p131 = scmp.eq.s32.totalorder %s22, 0
      %p132 = por %p130, %p131
      %p133 = scmp.ne.s32.totalorder %s119, %s120
      %p134 = scmp.eq.s32.totalorder %s23, 1
      %p135 = por %p133, %p134
      %p137 = scmp.ne.s32.totalorder %s120, %s136
      %p138 = scmp.eq.s32.totalorder %s23, 0
      %p139 = por %p137, %p138
      %p140 = scmp.le.s32.totalorder 1, %s17
      %p141 = scmp.lt.s32.totalorder %s17, 3
      %p142 = pnand %p140, %p141
      %p143 = pneg %p142
      // Predicated region
      $region9: #{tpu_custom_call.1} parent=5 // pred_check
        _
      $region10: #{tpu_custom_call.1} parent=5 // pred_check_branch
        %145 = sbr.rel (%p142) target = $region12
      $region11: #{tpu_custom_call.1} parent=5 // pred_region
        %s146 = ssub.s32 %s17, 1
        // Predicated region
        $region13: #{tpu_custom_call.1} parent=11 // pred_check
          %p147 = pneg %p64
        $region14: #{tpu_custom_call.1} parent=11 // pred_check_branch
          %149 = sbr.rel (%p147) target = $region16
        $region15: #{tpu_custom_call.1} parent=11 // pred_region
          _
        $region16: #{tpu_custom_call.1} parent=11 // pred_fallthru
          _
        // Predicated region
        $region17: #{tpu_custom_call.1} parent=11 // pred_check
          %p150 = pneg %p85
        $region18: #{tpu_custom_call.1} parent=11 // pred_check_branch
          %152 = sbr.rel (%p150) target = $region20
        $region19: #{tpu_custom_call.1} parent=11 // pred_region
          %s154 = ssub.s32 128, 128
          %155 = vsyncadd [#allocation6], %s154
          %s157 = sshll.u32 [#allocation5], 4
          %s158 = int_to_ptr.vmem [resolvable:$true] %s157
          %160 = dma.hbm_to_vmem [thread:$0]  %s2, 128, %s158, [#allocation6]
        $region20: #{tpu_custom_call.1} parent=11 // pred_fallthru
          _
        // Predicated region
        $region21: #{tpu_custom_call.1} parent=11 // pred_check
          %p161 = pneg %p106
        $region22: #{tpu_custom_call.1} parent=11 // pred_check_branch
          %163 = sbr.rel (%p161) target = $region24
        $region23: #{tpu_custom_call.1} parent=11 // pred_region
          _
        $region24: #{tpu_custom_call.1} parent=11 // pred_fallthru
          _
      $region12: #{tpu_custom_call.1} parent=5 // pred_fallthru
        _
      %p164 = scmp.lt.s32.totalorder %s17, 2
      // Predicated region
      $region25: #{tpu_custom_call.1} parent=5 // pred_check
        %p165 = pneg %p164
      $region26: #{tpu_custom_call.1} parent=5 // pred_check_branch
        %167 = sbr.rel (%p165) target = $region28
      $region27: #{tpu_custom_call.1} parent=5 // pred_region
        // Predicated region
        $region29: #{tpu_custom_call.1} parent=27 // pred_check
          %p168 = pneg %p37
        $region30: #{tpu_custom_call.1} parent=27 // pred_check_branch
          %170 = sbr.rel (%p168) target = $region32
        $region31: #{tpu_custom_call.1} parent=27 // pred_region
          %s171 = sand.u32 %s27, 1
          %s172 = scalar_lea.sflag [#allocation3], %s171
          %s173 = sand.u32 %s27, 1
          %s174 = smul.addr %s173, 32
          %s175 = scalar_lea.vmem [#allocation2], %s174
          %s176 = smul.u32 2, %s17
          %s178 = ssub.s32 512, 512
          %179 = vsyncadd %s172, %s178
          %s180 = smul.addr %s176, 2
          %s181 = smul.addr %s180, 128
          %s182 = scalar_lea.hbm %s0, %s181
          %s183 = sshll.u32 %s175, 4
          %s184 = int_to_ptr.vmem [resolvable:$true] %s183
          %189 = dma.hbm_to_vmem [thread:$0]  %s182, 512, %s184, %s172, 256, 256, 16
        $region32: #{tpu_custom_call.1} parent=27 // pred_fallthru
          _
      $region28: #{tpu_custom_call.1} parent=5 // pred_fallthru
        _
      %p190 = scmp.le.s32.totalorder 1, %s17
      %p191 = scmp.lt.s32.totalorder %s17, 3
      %p192 = pnand %p190, %p191
      %p193 = pneg %p192
      // Predicated region
      $region33: #{tpu_custom_call.1} parent=5 // pred_check
        _
      $region34: #{tpu_custom_call.1} parent=5 // pred_check_branch
        %195 = sbr.rel (%p192) target = $region36
      $region35: #{tpu_custom_call.1} parent=5 // pred_region
        %s196 = ssub.s32 %s17, 1
        %s197 = sand.u32 %s30, 1
        %s198 = scalar_lea.sflag [#allocation3], %s197
        %s199 = sand.u32 %s30, 1
        %s200 = smul.addr %s199, 32
        %s201 = scalar_lea.vmem [#allocation2], %s200
        // Predicated region
        $region37: #{tpu_custom_call.1} parent=35 // pred_check
          %p202 = pneg %p43
        $region38: #{tpu_custom_call.1} parent=35 // pred_check_branch
          %204 = sbr.rel (%p202) target = $region40
        $region39: #{tpu_custom_call.1} parent=35 // pred_region
          %205 = dma.done %s198, 512
        $region40: #{tpu_custom_call.1} parent=35 // pred_fallthru
          _
        // Predicated region
        $region41: #{tpu_custom_call.1} parent=35 // pred_check
          %p206 = pneg %p85
        $region42: #{tpu_custom_call.1} parent=35 // pred_check_branch
          %208 = sbr.rel (%p206) target = $region44
        $region43: #{tpu_custom_call.1} parent=35 // pred_region
          %209 = dma.done [#allocation6], 128
        $region44: #{tpu_custom_call.1} parent=35 // pred_fallthru
          _
        %s210 = sand.u32 %s30, 1
        %s211 = scalar_lea.sflag [#allocation3], %s210
        %s212 = sand.u32 %s30, 1
        %s213 = smul.addr %s212, 32
        %s214 = scalar_lea.vmem [#allocation2], %s213
        %p215 = pneg %p43
        %p216 = pneg %p40
        %p217 = pneg %p64
        %p218 = pneg %p61
        %p219 = pneg %p85
        %p220 = pneg %p82
        %p221 = pneg %p106
        %p222 = pneg %p103
        %p223 = pneg %p132
        %p224 = pneg %p129
        %s225 = sand.u32 %s119, 1
        %s226 = scalar_lea.sflag [#allocation4], %s225
        %s227 = sand.u32 %s119, 1
        %s228 = smul.addr %s227, 32
        %s229 = scalar_lea.vmem [#allocation7], %s228
        %s230 = smul.u32 2, %s22
        %s231 = smul.u32 2, %s22
        %v232 = vlaneseq
        %v233 = vand.u32 %v232, 127
        %v234 = vadd.s32 %v233, 128
        %vm235 = vcmp.lt.s32.totalorder %v233, 0
        %v236 = vsub.s32 0, %v233
        %v237 = vsel %vm235, %v236, %v233
        %v238 = vshrl.u32 %v237, 4
        %v239 = vand.u32 %v237, 15
        %v240 = vsub.s32 0, %v239
        %v241 = vsel %vm235, %v240, %v239
        %vm242 = vcmp.lt.s32.totalorder %v234, 0
        %v243 = vsub.s32 0, %v234
        %v244 = vsel %vm242, %v243, %v234
        %v245 = vshrl.u32 %v244, 4
        %v246 = vand.u32 %v244, 15
        %v247 = vsub.s32 0, %v246
        %v248 = vsel %vm242, %v247, %v246
        %vm249 = vcmp.ne.s32.totalorder %v241, 0
        %vm250 = vcmp.ne.s32.totalorder %v248, 0
        %vm251 = vcmp.lt.s32.totalorder %v241, 0
        %vm252 = vcmp.lt.s32.totalorder %v248, 0
        %vm253 = vmand %vm251, %vm249
        %vm254 = vmand %vm252, %vm250
        %v255 = vadd.s32 %v241, 16
        %v256 = vadd.s32 %v248, 16
        %v257 = vsel %vm253, %v255, %v241
        %v258 = vsel %vm254, %v256, %v248
        %vm259 = vcmp.ge.s32.totalorder %v257, 1
        %vm260 = vcmp.ge.s32.totalorder %v258, 1
        %vm261 = vcmp.le.s32.totalorder %v257, 14
        %vm262 = vcmp.le.s32.totalorder %v258, 14
        %v263 = vld [vmem:[%s3] sm:$0xff]
        %v264 = vld [vmem:[%s201] sm:$0xff]
        %v265 = vld [vmem:[%s201 + $0x8] sm:$0xff]
        %268 = vrot.lane.b32.xlu0 %v264, 17
        %v269 = vpop.permute.xlu0 %268
        %270 = vrot.lane.b32.xlu0 %v265, 17
        %v271 = vpop.permute.xlu0 %270
        %vm272 = vcmask 138240
        %v273 = vsel %vm272, %v269, %v271
        %v277 = vsel %vm272, 0.0, %v269
        %v278 = vsel %vm272, %v271, 0.0
        %v279 = vsel %vm259, 1, 0
        %v280 = vsel %vm260, 1, 0
        %vm281 = vcmp.eq.s32.totalorder %v279, 1
        %vm282 = vcmp.eq.s32.totalorder %v280, 1
        %v283 = vsel %vm281, %v277, 0.0
        %v284 = vsel %vm282, %v273, 0.0
        %v285 = vsel %vm261, 1, 0
        %v286 = vsel %vm262, 1, 0
        %vm287 = vcmp.eq.s32.totalorder %v285, 1
        %vm288 = vcmp.eq.s32.totalorder %v286, 1
        %291 = vrot.lane.b32.xlu0 %v277, 126
        %v292 = vpop.permute.xlu0 %291
        %293 = vrot.lane.b32.xlu0 %v273, 126
        %v294 = vpop.permute.xlu0 %293
        %295 = vrot.lane.b32.xlu0 %v278, 126
        %v296 = vpop.permute.xlu0 %295
        %vm297 = vcmask 1031168
        %v298 = vsel %vm297, %v292, %v294
        %v299 = vsel %vm297, %v294, %v296
        %v302 = vsel %vm287, %v298, 0.0
        %v303 = vsel %vm288, %v299, 0.0
        %304 = vrot.lane.b32.xlu0 %v277, 112
        %v305 = vpop.permute.xlu0 %304
        %306 = vrot.lane.b32.xlu0 %v273, 112
        %v307 = vpop.permute.xlu0 %306
        %308 = vrot.lane.b32.xlu0 %v278, 112
        %v309 = vpop.permute.xlu0 %308
        %vm310 = vcmask 916480
        %v311 = vsel %vm310, %v305, %v307
        %v312 = vsel %vm310, %v307, %v309
        %v315 = vsel %vm281, %v311, 0.0
        %v316 = vsel %vm282, %v312, 0.0
        %317 = vrot.lane.b32.xlu0 %v277, 110
        %v318 = vpop.permute.xlu0 %317
        %319 = vrot.lane.b32.xlu0 %v273, 110
        %v320 = vpop.permute.xlu0 %319
        %321 = vrot.lane.b32.xlu0 %v278, 110
        %v322 = vpop.permute.xlu0 %321
        %vm323 = vcmask 900096
        %v324 = vsel %vm323, %v318, %v320
        %v325 = vsel %vm323, %v320, %v322
        %v328 = vsel %vm287, %v324, 0.0
        %v329 = vsel %vm288, %v325, 0.0
        %330 = vrot.lane.b32.xlu0 %v277, 96
        %v331 = vpop.permute.xlu0 %330
        %332 = vrot.lane.b32.xlu0 %v273, 96
        %v333 = vpop.permute.xlu0 %332
        %334 = vrot.lane.b32.xlu0 %v278, 96
        %v335 = vpop.permute.xlu0 %334
        %vm336 = vcmask 785408
        %v337 = vsel %vm336, %v331, %v333
        %v338 = vsel %vm336, %v333, %v335
        %v341 = vsel %vm281, %v337, 0.0
        %v342 = vsel %vm282, %v338, 0.0
        %343 = vrot.lane.b32.xlu0 %v277, 94
        %v344 = vpop.permute.xlu0 %343
        %345 = vrot.lane.b32.xlu0 %v273, 94
        %v346 = vpop.permute.xlu0 %345
        %347 = vrot.lane.b32.xlu0 %v278, 94
        %v348 = vpop.permute.xlu0 %347
        %vm349 = vcmask 769024
        %v350 = vsel %vm349, %v344, %v346
        %v351 = vsel %vm349, %v346, %v348
        %v354 = vsel %vm287, %v350, 0.0
        %v355 = vsel %vm288, %v351, 0.0
        %356 = vrot.lane.b32.xlu0 %v277, 127
        %v357 = vpop.permute.xlu0 %356
        %358 = vrot.lane.b32.xlu0 %v273, 127
        %v359 = vpop.permute.xlu0 %358
        %360 = vrot.lane.b32.xlu0 %v278, 127
        %v361 = vpop.permute.xlu0 %360
        %vm362 = vcmask 1039360
        %v363 = vsel %vm362, %v357, %v359
        %v364 = vsel %vm362, %v359, %v361
        %367 = vrot.lane.b32.xlu0 %v277, 111
        %v368 = vpop.permute.xlu0 %367
        %369 = vrot.lane.b32.xlu0 %v273, 111
        %v370 = vpop.permute.xlu0 %369
        %371 = vrot.lane.b32.xlu0 %v278, 111
        %v372 = vpop.permute.xlu0 %371
        %vm373 = vcmask 908288
        %v374 = vsel %vm373, %v368, %v370
        %v375 = vsel %vm373, %v370, %v372
        %378 = vrot.lane.b32.xlu0 %v277, 95
        %v379 = vpop.permute.xlu0 %378
        %380 = vrot.lane.b32.xlu0 %v273, 95
        %v381 = vpop.permute.xlu0 %380
        %382 = vrot.lane.b32.xlu0 %v278, 95
        %v383 = vpop.permute.xlu0 %382
        %vm384 = vcmask 777216
        %v385 = vsel %vm384, %v379, %v381
        %v386 = vsel %vm384, %v381, %v383
        %s389 = scalar_lea.vmem %s201, 16 [#allocation2]
        %v390 = vld [vmem:[%s389] sm:$0xff]
        %v391 = vld [vmem:[%s389 + $0x8] sm:$0xff]
        %394 = vrot.lane.b32.xlu0 %v390, 17
        %v395 = vpop.permute.xlu0 %394
        %396 = vrot.lane.b32.xlu0 %v391, 17
        %v397 = vpop.permute.xlu0 %396
        %v398 = vsel %vm272, %v395, %v397
        %v402 = vsel %vm272, 0.0, %v395
        %v403 = vsel %vm272, %v397, 0.0
        %v404 = vsel %vm281, %v402, 0.0
        %v405 = vsel %vm282, %v398, 0.0
        %408 = vrot.lane.b32.xlu0 %v402, 126
        %v409 = vpop.permute.xlu0 %408
        %410 = vrot.lane.b32.xlu0 %v398, 126
        %v411 = vpop.permute.xlu0 %410
        %412 = vrot.lane.b32.xlu0 %v403, 126
        %v413 = vpop.permute.xlu0 %412
        %v414 = vsel %vm297, %v409, %v411
        %v415 = vsel %vm297, %v411, %v413
        %v418 = vsel %vm287, %v414, 0.0
        %v419 = vsel %vm288, %v415, 0.0
        %420 = vrot.lane.b32.xlu0 %v402, 112
        %v421 = vpop.permute.xlu0 %420
        %422 = vrot.lane.b32.xlu0 %v398, 112
        %v423 = vpop.permute.xlu0 %422
        %424 = vrot.lane.b32.xlu0 %v403, 112
        %v425 = vpop.permute.xlu0 %424
        %v426 = vsel %vm310, %v421, %v423
        %v427 = vsel %vm310, %v423, %v425
        %v430 = vsel %vm281, %v426, 0.0
        %v431 = vsel %vm282, %v427, 0.0
        %432 = vrot.lane.b32.xlu0 %v402, 110
        %v433 = vpop.permute.xlu0 %432
        %434 = vrot.lane.b32.xlu0 %v398, 110
        %v435 = vpop.permute.xlu0 %434
        %436 = vrot.lane.b32.xlu0 %v403, 110
        %v437 = vpop.permute.xlu0 %436
        %v438 = vsel %vm323, %v433, %v435
        %v439 = vsel %vm323, %v435, %v437
        %v442 = vsel %vm287, %v438, 0.0
        %v443 = vsel %vm288, %v439, 0.0
        %444 = vrot.lane.b32.xlu0 %v402, 96
        %v445 = vpop.permute.xlu0 %444
        %446 = vrot.lane.b32.xlu0 %v398, 96
        %v447 = vpop.permute.xlu0 %446
        %448 = vrot.lane.b32.xlu0 %v403, 96
        %v449 = vpop.permute.xlu0 %448
        %v450 = vsel %vm336, %v445, %v447
        %v451 = vsel %vm336, %v447, %v449
        %v454 = vsel %vm281, %v450, 0.0
        %v455 = vsel %vm282, %v451, 0.0
        %456 = vrot.lane.b32.xlu0 %v402, 94
        %v457 = vpop.permute.xlu0 %456
        %458 = vrot.lane.b32.xlu0 %v398, 94
        %v459 = vpop.permute.xlu0 %458
        %460 = vrot.lane.b32.xlu0 %v403, 94
        %v461 = vpop.permute.xlu0 %460
        %v462 = vsel %vm349, %v457, %v459
        %v463 = vsel %vm349, %v459, %v461
        %v466 = vsel %vm287, %v462, 0.0
        %v467 = vsel %vm288, %v463, 0.0
        %468 = vrot.lane.b32.xlu0 %v402, 127
        %v469 = vpop.permute.xlu0 %468
        %470 = vrot.lane.b32.xlu0 %v398, 127
        %v471 = vpop.permute.xlu0 %470
        %472 = vrot.lane.b32.xlu0 %v403, 127
        %v473 = vpop.permute.xlu0 %472
        %v474 = vsel %vm362, %v469, %v471
        %v475 = vsel %vm362, %v471, %v473
        %478 = vrot.lane.b32.xlu0 %v402, 111
        %v479 = vpop.permute.xlu0 %478
        %480 = vrot.lane.b32.xlu0 %v398, 111
        %v481 = vpop.permute.xlu0 %480
        %482 = vrot.lane.b32.xlu0 %v403, 111
        %v483 = vpop.permute.xlu0 %482
        %v484 = vsel %vm373, %v479, %v481
        %v485 = vsel %vm373, %v481, %v483
        %488 = vrot.lane.b32.xlu0 %v402, 95
        %v489 = vpop.permute.xlu0 %488
        %490 = vrot.lane.b32.xlu0 %v398, 95
        %v491 = vpop.permute.xlu0 %490
        %492 = vrot.lane.b32.xlu0 %v403, 95
        %v493 = vpop.permute.xlu0 %492
        %v494 = vsel %vm384, %v489, %v491
        %v495 = vsel %vm384, %v491, %v493
        %v498 = vld [vmem:[%s1] sm:$0xff]
        %vm499 = vcmask 588800
        %v501 = vsel %vm499, %v498, 0
        %503 = vmatprep.subr.mxu0 0.0
        %504 = vmatpush1.msra.mxu0 0.0
        %505 = vmatprep.subr.mxu0 0.0
        %506 = vmatpush1.msra.mxu0 0.0
        %507 = vmatprep.subr.mxu0 0.0
        %508 = vmatpush1.msra.mxu0 0.0
        %509 = vmatprep.subr.mxu0 0.0
        %510 = vmatpush1.msra.mxu0 0.0
        %511 = vmatprep.subr.mxu0 0.0
        %512 = vmatpush1.msra.mxu0 0.0
        %513 = vmatprep.subr.mxu0 0.0
        %514 = vmatpush1.msra.mxu0 0.0
        %515 = vmatprep.subr.mxu0 0.0
        %516 = vmatpush1.msra.mxu0 0.0
        %517 = vmatprep.subr.mxu0 %v355
        %518 = vmatpush1.msra.mxu0 %v354
        %519 = vmatprep.subr.mxu0 %v386
        %520 = vmatpush1.msra.mxu0 %v385
        %521 = vmatprep.subr.mxu0 %v342
        %522 = vmatpush1.msra.mxu0 %v341
        %523 = vmatprep.subr.mxu0 %v329
        %524 = vmatpush1.msra.mxu0 %v328
        %525 = vmatprep.subr.mxu0 %v375
        %526 = vmatpush1.msra.mxu0 %v374
        %527 = vmatprep.subr.mxu0 %v316
        %528 = vmatpush1.msra.mxu0 %v315
        %529 = vmatprep.subr.mxu0 %v303
        %530 = vmatpush1.msra.mxu0 %v302
        %531 = vmatprep.subr.mxu0 %v364
        %532 = vmatpush1.msra.mxu0 %v363
        %533 = vmatprep.subr.mxu0 %v284
        %534 = vmatpush1.msra.mxu0 %v283
        %535 = vmatprep.subr.mxu0 0.0
        %536 = vmatpush2.msra.mxu0 0.0
        %537 = vmatprep.subr.mxu0 0.0
        %538 = vmatpush2.msra.mxu0 0.0
        %539 = vmatprep.subr.mxu0 0.0
        %540 = vmatpush2.msra.mxu0 0.0
        %541 = vmatprep.subr.mxu0 0.0
        %542 = vmatpush2.msra.mxu0 0.0
        %543 = vmatprep.subr.mxu0 0.0
        %544 = vmatpush2.msra.mxu0 0.0
        %545 = vmatprep.subr.mxu0 0.0
        %546 = vmatpush2.msra.mxu0 0.0
        %547 = vmatprep.subr.mxu0 0.0
        %548 = vmatpush2.msra.mxu0 0.0
        %549 = vmatprep.subr.mxu0 0.0
        %550 = vmatpush2.msra.mxu0 0.0
        %551 = vmatprep.subr.mxu0 0.0
        %552 = vmatpush2.msra.mxu0 0.0
        %553 = vmatprep.subr.mxu0 0.0
        %554 = vmatpush2.msra.mxu0 0.0
        %555 = vmatprep.subr.mxu0 0.0
        %556 = vmatpush2.msra.mxu0 0.0
        %557 = vmatprep.subr.mxu0 0.0
        %558 = vmatpush2.msra.mxu0 0.0
        %559 = vmatprep.subr.mxu0 0.0
        %560 = vmatpush2.msra.mxu0 0.0
        %561 = vmatprep.subr.mxu0 0.0
        %562 = vmatpush2.msra.mxu0 0.0
        %563 = vmatprep.subr.mxu0 0.0
        %564 = vmatpush2.msra.mxu0 0.0
        %565 = vmatprep.subr.mxu0 0.0
        %566 = vmatpush2.msra.mxu0 0.0
        %567 = vmatprep.mubr.f32.mxu0 0.0
        %568 = vmatmul.mubr.f32.gmra.mxu0 %v501
        %v569 = vpop.f32.mrf.mxu0
        %v570 = vadd.f32 0.0, %v569
        %v571 = vpop.f32.mrf.mxu0
        %v572 = vadd.f32 0.0, %v571
        %573 = vdwg.mxu0
        %574 = vmatprep.subr.mxu0 0.0
        %575 = vmatpush1.msra.mxu0 0.0
        %576 = vmatprep.subr.mxu0 0.0
        %577 = vmatpush1.msra.mxu0 0.0
        %578 = vmatprep.subr.mxu0 0.0
        %579 = vmatpush1.msra.mxu0 0.0
        %580 = vmatprep.subr.mxu0 0.0
        %581 = vmatpush1.msra.mxu0 0.0
        %582 = vmatprep.subr.mxu0 0.0
        %583 = vmatpush1.msra.mxu0 0.0
        %584 = vmatprep.subr.mxu0 0.0
        %585 = vmatpush1.msra.mxu0 0.0
        %586 = vmatprep.subr.mxu0 0.0
        %587 = vmatpush1.msra.mxu0 0.0
        %588 = vmatprep.subr.mxu0 %v467
        %589 = vmatpush1.msra.mxu0 %v466
        %590 = vmatprep.subr.mxu0 %v495
        %591 = vmatpush1.msra.mxu0 %v494
        %592 = vmatprep.subr.mxu0 %v455
        %593 = vmatpush1.msra.mxu0 %v454
        %594 = vmatprep.subr.mxu0 %v443
        %595 = vmatpush1.msra.mxu0 %v442
        %596 = vmatprep.subr.mxu0 %v485
        %597 = vmatpush1.msra.mxu0 %v484
        %598 = vmatprep.subr.mxu0 %v431
        %599 = vmatpush1.msra.mxu0 %v430
        %600 = vmatprep.subr.mxu0 %v419
        %601 = vmatpush1.msra.mxu0 %v418
        %602 = vmatprep.subr.mxu0 %v475
        %603 = vmatpush1.msra.mxu0 %v474
        %604 = vmatprep.subr.mxu0 %v405
        %605 = vmatpush1.msra.mxu0 %v404
        %606 = vmatprep.subr.mxu0 0.0
        %607 = vmatpush2.msra.mxu0 0.0
        %608 = vmatprep.subr.mxu0 0.0
        %609 = vmatpush2.msra.mxu0 0.0
        %610 = vmatprep.subr.mxu0 0.0
        %611 = vmatpush2.msra.mxu0 0.0
        %612 = vmatprep.subr.mxu0 0.0
        %613 = vmatpush2.msra.mxu0 0.0
        %614 = vmatprep.subr.mxu0 0.0
        %615 = vmatpush2.msra.mxu0 0.0
        %616 = vmatprep.subr.mxu0 0.0
        %617 = vmatpush2.msra.mxu0 0.0
        %618 = vmatprep.subr.mxu0 0.0
        %619 = vmatpush2.msra.mxu0 0.0
        %620 = vmatprep.subr.mxu0 0.0
        %621 = vmatpush2.msra.mxu0 0.0
        %622 = vmatprep.subr.mxu0 0.0
        %623 = vmatpush2.msra.mxu0 0.0
        %624 = vmatprep.subr.mxu0 0.0
        %625 = vmatpush2.msra.mxu0 0.0
        %626 = vmatprep.subr.mxu0 0.0
        %627 = vmatpush2.msra.mxu0 0.0
        %628 = vmatprep.subr.mxu0 0.0
        %629 = vmatpush2.msra.mxu0 0.0
        %630 = vmatprep.subr.mxu0 0.0
        %631 = vmatpush2.msra.mxu0 0.0
        %632 = vmatprep.subr.mxu0 0.0
        %633 = vmatpush2.msra.mxu0 0.0
        %634 = vmatprep.subr.mxu0 0.0
        %635 = vmatpush2.msra.mxu0 0.0
        %636 = vmatprep.subr.mxu0 0.0
        %637 = vmatpush2.msra.mxu0 0.0
        %638 = vmatprep.mubr.f32.mxu0 0.0
        %639 = vmatmul.mubr.f32.gmra.mxu0 %v501
        %v640 = vpop.f32.mrf.mxu0
        %v641 = vadd.f32 0.0, %v640
        %v642 = vpop.f32.mrf.mxu0
        %v643 = vadd.f32 0.0, %v642
        %644 = vdwg.mxu0
        %v645 = vadd.f32 %v570, %v572
        %646 = vadd.xlane.f32.xlu0 %v645
        %v647 = vpop.xlane.xlu0 %646
        %v648 = vrcp.pop 256.0
        %v649 = vmul.f32 %v647, %v648
        %v650 = vsub.f32 %v570, %v649
        %v651 = vsub.f32 %v572, %v649
        %v652 = vmul.f32 %v650, %v650
        %v653 = vmul.f32 %v651, %v651
        %v654 = vadd.f32 %v652, %v653
        %655 = vadd.xlane.f32.xlu0 %v654
        %v656 = vpop.xlane.xlu0 %655
        %v657 = vmul.f32 %v656, %v648
        %v658 = vadd.f32 %v657, 1e-05
        %v659 = vrsqrt.pop %v658
        %v660 = vmul.f32 %v263, %v659
        %v661 = vmul.f32 %v649, %v660
        %663 = vrot.lane.b32.xlu0 %v661, 1
        %v664 = vpop.permute.xlu0 %663
        %v666 = vsub.f32 %v263, %v664
        %668 = vset.pattern.permute.xlu0 0
        %669 = vperm.xlu0 %668, %v660
        %v670 = vpop.permute.xlu0 %669
        %v672 = vmul.f32 %v570, %v670
        %v673 = vmul.f32 %v572, %v670
        %675 = vset.pattern.permute.xlu0 1
        %676 = vperm.xlu0 %675, %v666
        %v677 = vpop.permute.xlu0 %676
        %v679 = vadd.f32 %v672, %v677
        %v680 = vadd.f32 %v673, %v677
        %v681 = vmax.f32 %v679, 0.0
        %v682 = vmax.f32 %v680, 0.0
        %685 = vrot.lane.b32.xlu0 %v681, 17
        %v686 = vpop.permute.xlu0 %685
        %687 = vrot.lane.b32.xlu0 %v682, 17
        %v688 = vpop.permute.xlu0 %687
        %v689 = vsel %vm272, %v686, %v688
        %v693 = vsel %vm272, 0.0, %v686
        %v694 = vsel %vm272, %v688, 0.0
        %v695 = vsel %vm281, %v693, 0.0
        %v696 = vsel %vm282, %v689, 0.0
        %699 = vrot.lane.b32.xlu0 %v693, 126
        %v700 = vpop.permute.xlu0 %699
        %701 = vrot.lane.b32.xlu0 %v689, 126
        %v702 = vpop.permute.xlu0 %701
        %703 = vrot.lane.b32.xlu0 %v694, 126
        %v704 = vpop.permute.xlu0 %703
        %v705 = vsel %vm297, %v700, %v702
        %v706 = vsel %vm297, %v702, %v704
        %v709 = vsel %vm287, %v705, 0.0
        %v710 = vsel %vm288, %v706, 0.0
        %711 = vrot.lane.b32.xlu0 %v693, 112
        %v712 = vpop.permute.xlu0 %711
        %713 = vrot.lane.b32.xlu0 %v689, 112
        %v714 = vpop.permute.xlu0 %713
        %715 = vrot.lane.b32.xlu0 %v694, 112
        %v716 = vpop.permute.xlu0 %715
        %v717 = vsel %vm310, %v712, %v714
        %v718 = vsel %vm310, %v714, %v716
        %v721 = vsel %vm281, %v717, 0.0
        %v722 = vsel %vm282, %v718, 0.0
        %723 = vrot.lane.b32.xlu0 %v693, 110
        %v724 = vpop.permute.xlu0 %723
        %725 = vrot.lane.b32.xlu0 %v689, 110
        %v726 = vpop.permute.xlu0 %725
        %727 = vrot.lane.b32.xlu0 %v694, 110
        %v728 = vpop.permute.xlu0 %727
        %v729 = vsel %vm323, %v724, %v726
        %v730 = vsel %vm323, %v726, %v728
        %v733 = vsel %vm287, %v729, 0.0
        %v734 = vsel %vm288, %v730, 0.0
        %735 = vrot.lane.b32.xlu0 %v693, 96
        %v736 = vpop.permute.xlu0 %735
        %737 = vrot.lane.b32.xlu0 %v689, 96
        %v738 = vpop.permute.xlu0 %737
        %739 = vrot.lane.b32.xlu0 %v694, 96
        %v740 = vpop.permute.xlu0 %739
        %v741 = vsel %vm336, %v736, %v738
        %v742 = vsel %vm336, %v738, %v740
        %v745 = vsel %vm281, %v741, 0.0
        %v746 = vsel %vm282, %v742, 0.0
        %747 = vrot.lane.b32.xlu0 %v693, 94
        %v748 = vpop.permute.xlu0 %747
        %749 = vrot.lane.b32.xlu0 %v689, 94
        %v750 = vpop.permute.xlu0 %749
        %751 = vrot.lane.b32.xlu0 %v694, 94
        %v752 = vpop.permute.xlu0 %751
        %v753 = vsel %vm349, %v748, %v750
        %v754 = vsel %vm349, %v750, %v752
        %v757 = vsel %vm287, %v753, 0.0
        %v758 = vsel %vm288, %v754, 0.0
        %759 = vrot.lane.b32.xlu0 %v693, 127
        %v760 = vpop.permute.xlu0 %759
        %761 = vrot.lane.b32.xlu0 %v689, 127
        %v762 = vpop.permute.xlu0 %761
        %763 = vrot.lane.b32.xlu0 %v694, 127
        %v764 = vpop.permute.xlu0 %763
        %v765 = vsel %vm362, %v760, %v762
        %v766 = vsel %vm362, %v762, %v764
        %769 = vrot.lane.b32.xlu0 %v693, 111
        %v770 = vpop.permute.xlu0 %769
        %771 = vrot.lane.b32.xlu0 %v689, 111
        %v772 = vpop.permute.xlu0 %771
        %773 = vrot.lane.b32.xlu0 %v694, 111
        %v774 = vpop.permute.xlu0 %773
        %v775 = vsel %vm373, %v770, %v772
        %v776 = vsel %vm373, %v772, %v774
        %779 = vrot.lane.b32.xlu0 %v693, 95
        %v780 = vpop.permute.xlu0 %779
        %781 = vrot.lane.b32.xlu0 %v689, 95
        %v782 = vpop.permute.xlu0 %781
        %783 = vrot.lane.b32.xlu0 %v694, 95
        %v784 = vpop.permute.xlu0 %783
        %v785 = vsel %vm384, %v780, %v782
        %v786 = vsel %vm384, %v782, %v784
        %v789 = vadd.f32 %v641, %v643
        %790 = vadd.xlane.f32.xlu0 %v789
        %v791 = vpop.xlane.xlu0 %790
        %v792 = vmul.f32 %v791, %v648
        %v793 = vsub.f32 %v641, %v792
        %v794 = vsub.f32 %v643, %v792
        %v795 = vmul.f32 %v793, %v793
        %v796 = vmul.f32 %v794, %v794
        %v797 = vadd.f32 %v795, %v796
        %798 = vadd.xlane.f32.xlu0 %v797
        %v799 = vpop.xlane.xlu0 %798
        %v800 = vmul.f32 %v799, %v648
        %v801 = vadd.f32 %v800, 1e-05
        %v802 = vrsqrt.pop %v801
        %v803 = vmul.f32 %v263, %v802
        %v804 = vmul.f32 %v792, %v803
        %806 = vrot.lane.b32.xlu0 %v804, 1
        %v807 = vpop.permute.xlu0 %806
        %v809 = vsub.f32 %v263, %v807
        %811 = vset.pattern.permute.xlu0 0
        %812 = vperm.xlu0 %811, %v803
        %v813 = vpop.permute.xlu0 %812
        %v815 = vmul.f32 %v641, %v813
        %v816 = vmul.f32 %v643, %v813
        %818 = vset.pattern.permute.xlu0 1
        %819 = vperm.xlu0 %818, %v809
        %v820 = vpop.permute.xlu0 %819
        %v822 = vadd.f32 %v815, %v820
        %v823 = vadd.f32 %v816, %v820
        %v824 = vmax.f32 %v822, 0.0
        %v825 = vmax.f32 %v823, 0.0
        %828 = vrot.lane.b32.xlu0 %v824, 17
        %v829 = vpop.permute.xlu0 %828
        %830 = vrot.lane.b32.xlu0 %v825, 17
        %v831 = vpop.permute.xlu0 %830
        %v832 = vsel %vm272, %v829, %v831
        %v836 = vsel %vm272, 0.0, %v829
        %v837 = vsel %vm272, %v831, 0.0
        %v838 = vsel %vm281, %v836, 0.0
        %v839 = vsel %vm282, %v832, 0.0
        %842 = vrot.lane.b32.xlu0 %v836, 126
        %v843 = vpop.permute.xlu0 %842
        %844 = vrot.lane.b32.xlu0 %v832, 126
        %v845 = vpop.permute.xlu0 %844
        %846 = vrot.lane.b32.xlu0 %v837, 126
        %v847 = vpop.permute.xlu0 %846
        %v848 = vsel %vm297, %v843, %v845
        %v849 = vsel %vm297, %v845, %v847
        %v852 = vsel %vm287, %v848, 0.0
        %v853 = vsel %vm288, %v849, 0.0
        %854 = vrot.lane.b32.xlu0 %v836, 112
        %v855 = vpop.permute.xlu0 %854
        %856 = vrot.lane.b32.xlu0 %v832, 112
        %v857 = vpop.permute.xlu0 %856
        %858 = vrot.lane.b32.xlu0 %v837, 112
        %v859 = vpop.permute.xlu0 %858
        %v860 = vsel %vm310, %v855, %v857
        %v861 = vsel %vm310, %v857, %v859
        %v864 = vsel %vm281, %v860, 0.0
        %v865 = vsel %vm282, %v861, 0.0
        %866 = vrot.lane.b32.xlu0 %v836, 110
        %v867 = vpop.permute.xlu0 %866
        %868 = vrot.lane.b32.xlu0 %v832, 110
        %v869 = vpop.permute.xlu0 %868
        %870 = vrot.lane.b32.xlu0 %v837, 110
        %v871 = vpop.permute.xlu0 %870
        %v872 = vsel %vm323, %v867, %v869
        %v873 = vsel %vm323, %v869, %v871
        %v876 = vsel %vm287, %v872, 0.0
        %v877 = vsel %vm288, %v873, 0.0
        %878 = vrot.lane.b32.xlu0 %v836, 96
        %v879 = vpop.permute.xlu0 %878
        %880 = vrot.lane.b32.xlu0 %v832, 96
        %v881 = vpop.permute.xlu0 %880
        %882 = vrot.lane.b32.xlu0 %v837, 96
        %v883 = vpop.permute.xlu0 %882
        %v884 = vsel %vm336, %v879, %v881
        %v885 = vsel %vm336, %v881, %v883
        %v888 = vsel %vm281, %v884, 0.0
        %v889 = vsel %vm282, %v885, 0.0
        %890 = vrot.lane.b32.xlu0 %v836, 94
        %v891 = vpop.permute.xlu0 %890
        %892 = vrot.lane.b32.xlu0 %v832, 94
        %v893 = vpop.permute.xlu0 %892
        %894 = vrot.lane.b32.xlu0 %v837, 94
        %v895 = vpop.permute.xlu0 %894
        %v896 = vsel %vm349, %v891, %v893
        %v897 = vsel %vm349, %v893, %v895
        %v900 = vsel %vm287, %v896, 0.0
        %v901 = vsel %vm288, %v897, 0.0
        %902 = vrot.lane.b32.xlu0 %v836, 127
        %v903 = vpop.permute.xlu0 %902
        %904 = vrot.lane.b32.xlu0 %v832, 127
        %v905 = vpop.permute.xlu0 %904
        %906 = vrot.lane.b32.xlu0 %v837, 127
        %v907 = vpop.permute.xlu0 %906
        %v908 = vsel %vm362, %v903, %v905
        %v909 = vsel %vm362, %v905, %v907
        %912 = vrot.lane.b32.xlu0 %v836, 111
        %v913 = vpop.permute.xlu0 %912
        %914 = vrot.lane.b32.xlu0 %v832, 111
        %v915 = vpop.permute.xlu0 %914
        %916 = vrot.lane.b32.xlu0 %v837, 111
        %v917 = vpop.permute.xlu0 %916
        %v918 = vsel %vm373, %v913, %v915
        %v919 = vsel %vm373, %v915, %v917
        %922 = vrot.lane.b32.xlu0 %v836, 95
        %v923 = vpop.permute.xlu0 %922
        %924 = vrot.lane.b32.xlu0 %v832, 95
        %v925 = vpop.permute.xlu0 %924
        %926 = vrot.lane.b32.xlu0 %v837, 95
        %v927 = vpop.permute.xlu0 %926
        %v928 = vsel %vm384, %v923, %v925
        %v929 = vsel %vm384, %v925, %v927
        %v932 = vld [vmem:[#allocation5] sm:$0xff]
        %v934 = vsel %vm499, %v932, 0
        %936 = vmatprep.subr.mxu0 0.0
        %937 = vmatpush1.msra.mxu0 0.0
        %938 = vmatprep.subr.mxu0 0.0
        %939 = vmatpush1.msra.mxu0 0.0
        %940 = vmatprep.subr.mxu0 0.0
        %941 = vmatpush1.msra.mxu0 0.0
        %942 = vmatprep.subr.mxu0 0.0
        %943 = vmatpush1.msra.mxu0 0.0
        %944 = vmatprep.subr.mxu0 0.0
        %945 = vmatpush1.msra.mxu0 0.0
        %946 = vmatprep.subr.mxu0 0.0
        %947 = vmatpush1.msra.mxu0 0.0
        %948 = vmatprep.subr.mxu0 0.0
        %949 = vmatpush1.msra.mxu0 0.0
        %950 = vmatprep.subr.mxu0 %v758
        %951 = vmatpush1.msra.mxu0 %v757
        %952 = vmatprep.subr.mxu0 %v786
        %953 = vmatpush1.msra.mxu0 %v785
        %954 = vmatprep.subr.mxu0 %v746
        %955 = vmatpush1.msra.mxu0 %v745
        %956 = vmatprep.subr.mxu0 %v734
        %957 = vmatpush1.msra.mxu0 %v733
        %958 = vmatprep.subr.mxu0 %v776
        %959 = vmatpush1.msra.mxu0 %v775
        %960 = vmatprep.subr.mxu0 %v722
        %961 = vmatpush1.msra.mxu0 %v721
        %962 = vmatprep.subr.mxu0 %v710
        %963 = vmatpush1.msra.mxu0 %v709
        %964 = vmatprep.subr.mxu0 %v766
        %965 = vmatpush1.msra.mxu0 %v765
        %966 = vmatprep.subr.mxu0 %v696
        %967 = vmatpush1.msra.mxu0 %v695
        %968 = vmatprep.subr.mxu0 0.0
        %969 = vmatpush2.msra.mxu0 0.0
        %970 = vmatprep.subr.mxu0 0.0
        %971 = vmatpush2.msra.mxu0 0.0
        %972 = vmatprep.subr.mxu0 0.0
        %973 = vmatpush2.msra.mxu0 0.0
        %974 = vmatprep.subr.mxu0 0.0
        %975 = vmatpush2.msra.mxu0 0.0
        %976 = vmatprep.subr.mxu0 0.0
        %977 = vmatpush2.msra.mxu0 0.0
        %978 = vmatprep.subr.mxu0 0.0
        %979 = vmatpush2.msra.mxu0 0.0
        %980 = vmatprep.subr.mxu0 0.0
        %981 = vmatpush2.msra.mxu0 0.0
        %982 = vmatprep.subr.mxu0 0.0
        %983 = vmatpush2.msra.mxu0 0.0
        %984 = vmatprep.subr.mxu0 0.0
        %985 = vmatpush2.msra.mxu0 0.0
        %986 = vmatprep.subr.mxu0 0.0
        %987 = vmatpush2.msra.mxu0 0.0
        %988 = vmatprep.subr.mxu0 0.0
        %989 = vmatpush2.msra.mxu0 0.0
        %990 = vmatprep.subr.mxu0 0.0
        %991 = vmatpush2.msra.mxu0 0.0
        %992 = vmatprep.subr.mxu0 0.0
        %993 = vmatpush2.msra.mxu0 0.0
        %994 = vmatprep.subr.mxu0 0.0
        %995 = vmatpush2.msra.mxu0 0.0
        %996 = vmatprep.subr.mxu0 0.0
        %997 = vmatpush2.msra.mxu0 0.0
        %998 = vmatprep.subr.mxu0 0.0
        %999 = vmatpush2.msra.mxu0 0.0
        %1000 = vmatprep.mubr.f32.mxu0 0.0
        %1001 = vmatmul.mubr.f32.gmra.mxu0 %v934
        %v1002 = vpop.f32.mrf.mxu0
        %v1003 = vadd.f32 0.0, %v1002
        %v1004 = vpop.f32.mrf.mxu0
        %v1005 = vadd.f32 0.0, %v1004
        %1006 = vdwg.mxu0
        %1007 = vmatprep.subr.mxu0 0.0
        %1008 = vmatpush1.msra.mxu0 0.0
        %1009 = vmatprep.subr.mxu0 0.0
        %1010 = vmatpush1.msra.mxu0 0.0
        %1011 = vmatprep.subr.mxu0 0.0
        %1012 = vmatpush1.msra.mxu0 0.0
        %1013 = vmatprep.subr.mxu0 0.0
        %1014 = vmatpush1.msra.mxu0 0.0
        %1015 = vmatprep.subr.mxu0 0.0
        %1016 = vmatpush1.msra.mxu0 0.0
        %1017 = vmatprep.subr.mxu0 0.0
        %1018 = vmatpush1.msra.mxu0 0.0
        %1019 = vmatprep.subr.mxu0 0.0
        %1020 = vmatpush1.msra.mxu0 0.0
        %1021 = vmatprep.subr.mxu0 %v901
        %1022 = vmatpush1.msra.mxu0 %v900
        %1023 = vmatprep.subr.mxu0 %v929
        %1024 = vmatpush1.msra.mxu0 %v928
        %1025 = vmatprep.subr.mxu0 %v889
        %1026 = vmatpush1.msra.mxu0 %v888
        %1027 = vmatprep.subr.mxu0 %v877
        %1028 = vmatpush1.msra.mxu0 %v876
        %1029 = vmatprep.subr.mxu0 %v919
        %1030 = vmatpush1.msra.mxu0 %v918
        %1031 = vmatprep.subr.mxu0 %v865
        %1032 = vmatpush1.msra.mxu0 %v864
        %1033 = vmatprep.subr.mxu0 %v853
        %1034 = vmatpush1.msra.mxu0 %v852
        %1035 = vmatprep.subr.mxu0 %v909
        %1036 = vmatpush1.msra.mxu0 %v908
        %1037 = vmatprep.subr.mxu0 %v839
        %1038 = vmatpush1.msra.mxu0 %v838
        %1039 = vmatprep.subr.mxu0 0.0
        %1040 = vmatpush2.msra.mxu0 0.0
        %1041 = vmatprep.subr.mxu0 0.0
        %1042 = vmatpush2.msra.mxu0 0.0
        %1043 = vmatprep.subr.mxu0 0.0
        %1044 = vmatpush2.msra.mxu0 0.0
        %1045 = vmatprep.subr.mxu0 0.0
        %1046 = vmatpush2.msra.mxu0 0.0
        %1047 = vmatprep.subr.mxu0 0.0
        %1048 = vmatpush2.msra.mxu0 0.0
        %1049 = vmatprep.subr.mxu0 0.0
        %1050 = vmatpush2.msra.mxu0 0.0
        %1051 = vmatprep.subr.mxu0 0.0
        %1052 = vmatpush2.msra.mxu0 0.0
        %1053 = vmatprep.subr.mxu0 0.0
        %1054 = vmatpush2.msra.mxu0 0.0
        %1055 = vmatprep.subr.mxu0 0.0
        %1056 = vmatpush2.msra.mxu0 0.0
        %1057 = vmatprep.subr.mxu0 0.0
        %1058 = vmatpush2.msra.mxu0 0.0
        %1059 = vmatprep.subr.mxu0 0.0
        %1060 = vmatpush2.msra.mxu0 0.0
        %1061 = vmatprep.subr.mxu0 0.0
        %1062 = vmatpush2.msra.mxu0 0.0
        %1063 = vmatprep.subr.mxu0 0.0
        %1064 = vmatpush2.msra.mxu0 0.0
        %1065 = vmatprep.subr.mxu0 0.0
        %1066 = vmatpush2.msra.mxu0 0.0
        %1067 = vmatprep.subr.mxu0 0.0
        %1068 = vmatpush2.msra.mxu0 0.0
        %1069 = vmatprep.subr.mxu0 0.0
        %1070 = vmatpush2.msra.mxu0 0.0
        %1071 = vmatprep.mubr.f32.mxu0 0.0
        %1072 = vmatmul.mubr.f32.gmra.mxu0 %v934
        %v1073 = vpop.f32.mrf.mxu0
        %v1074 = vadd.f32 0.0, %v1073
        %v1075 = vpop.f32.mrf.mxu0
        %v1076 = vadd.f32 0.0, %v1075
        %1077 = vdwg.mxu0
        %v1078 = vadd.f32 %v1003, %v1005
        %1079 = vadd.xlane.f32.xlu0 %v1078
        %v1080 = vpop.xlane.xlu0 %1079
        %v1081 = vmul.f32 %v1080, %v648
        %v1082 = vsub.f32 %v1003, %v1081
        %v1083 = vsub.f32 %v1005, %v1081
        %v1084 = vmul.f32 %v1082, %v1082
        %v1085 = vmul.f32 %v1083, %v1083
        %v1086 = vadd.f32 %v1084, %v1085
        %1087 = vadd.xlane.f32.xlu0 %v1086
        %v1088 = vpop.xlane.xlu0 %1087
        %v1089 = vmul.f32 %v1088, %v648
        %v1090 = vadd.f32 %v1089, 1e-05
        %v1091 = vrsqrt.pop %v1090
        %v1092 = vmul.f32 %v263, %v1091
        %v1093 = vmul.f32 %v1081, %v1092
        %1095 = vrot.lane.b32.xlu0 %v1093, 1
        %v1096 = vpop.permute.xlu0 %1095
        %v1098 = vsub.f32 %v263, %v1096
        %1100 = vset.pattern.permute.xlu0 2
        %1101 = vperm.xlu0 %1100, %v1092
        %v1102 = vpop.permute.xlu0 %1101
        %v1104 = vmul.f32 %v1003, %v1102
        %v1105 = vmul.f32 %v1005, %v1102
        %1107 = vset.pattern.permute.xlu0 3
        %1108 = vperm.xlu0 %1107, %v1098
        %v1109 = vpop.permute.xlu0 %1108
        %v1111 = vadd.f32 %v1104, %v1109
        %v1112 = vadd.f32 %v1105, %v1109
        %v1113 = vadd.f32 %v264, %v1111
        %v1114 = vadd.f32 %v265, %v1112
        %1115 = vst [vmem:[%s229] sm:$0xff] %v1113
        %1116 = vst [vmem:[%s229 + $0x8] sm:$0xff] %v1114
        %v1117 = vld [vmem:[%s389] sm:$0xff]
        %v1118 = vld [vmem:[%s389 + $0x8] sm:$0xff]
        %v1119 = vadd.f32 %v1074, %v1076
        %1120 = vadd.xlane.f32.xlu0 %v1119
        %v1121 = vpop.xlane.xlu0 %1120
        %v1122 = vmul.f32 %v1121, %v648
        %v1123 = vsub.f32 %v1074, %v1122
        %v1124 = vsub.f32 %v1076, %v1122
        %v1125 = vmul.f32 %v1123, %v1123
        %v1126 = vmul.f32 %v1124, %v1124
        %v1127 = vadd.f32 %v1125, %v1126
        %1128 = vadd.xlane.f32.xlu0 %v1127
        %v1129 = vpop.xlane.xlu0 %1128
        %v1130 = vmul.f32 %v1129, %v648
        %v1131 = vadd.f32 %v1130, 1e-05
        %v1132 = vrsqrt.pop %v1131
        %v1133 = vmul.f32 %v263, %v1132
        %v1134 = vmul.f32 %v1122, %v1133
        %1136 = vrot.lane.b32.xlu0 %v1134, 1
        %v1137 = vpop.permute.xlu0 %1136
        %v1139 = vsub.f32 %v263, %v1137
        %1141 = vset.pattern.permute.xlu0 2
        %1142 = vperm.xlu0 %1141, %v1133
        %v1143 = vpop.permute.xlu0 %1142
        %v1145 = vmul.f32 %v1074, %v1143
        %v1146 = vmul.f32 %v1076, %v1143
        %1148 = vset.pattern.permute.xlu0 3
        %1149 = vperm.xlu0 %1148, %v1139
        %v1150 = vpop.permute.xlu0 %1149
        %v1152 = vadd.f32 %v1145, %v1150
        %v1153 = vadd.f32 %v1146, %v1150
        %v1154 = vadd.f32 %v1117, %v1152
        %v1155 = vadd.f32 %v1118, %v1153
        %s1156 = scalar_lea.vmem %s229, 16 [#allocation7]
        %1157 = vst [vmem:[%s1156] sm:$0xff] %v1154
        %1158 = vst [vmem:[%s1156 + $0x8] sm:$0xff] %v1155
        %s1159 = sand.u32 %s119, 1
        %s1160 = scalar_lea.sflag [#allocation4], %s1159
        %s1161 = sand.u32 %s119, 1
        %s1162 = smul.addr %s1161, 32
        %s1163 = scalar_lea.vmem [#allocation7], %s1162
        // Predicated region
        $region45: #{tpu_custom_call.1} parent=35 // pred_check
          %p1164 = pneg %p129
        $region46: #{tpu_custom_call.1} parent=35 // pred_check_branch
          %1166 = sbr.rel (%p1164) target = $region48
        $region47: #{tpu_custom_call.1} parent=35 // pred_region
          %s1167 = smul.u32 2, %s22
          %s1169 = ssub.s32 512, 512
          %1170 = vsyncadd %s1160, %s1169
          %s1171 = smul.addr %s1167, 2
          %s1172 = smul.addr %s1171, 128
          %s1173 = scalar_lea.hbm %s4, %s1172
          %s1174 = sshll.u32 %s1163, 4
          %s1175 = int_to_ptr.vmem [resolvable:$true] %s1174
          %1180 = dma.vmem_to_hbm [thread:$0]  %s1175, 512, %s1173, %s1160, 256, 256, 16
        $region48: #{tpu_custom_call.1} parent=35 // pred_fallthru
          _
      $region36: #{tpu_custom_call.1} parent=5 // pred_fallthru
        _
      %p1181 = scmp.le.s32.totalorder 2, %s17
      // Predicated region
      $region49: #{tpu_custom_call.1} parent=5 // pred_check
        %p1182 = pneg %p1181
      $region50: #{tpu_custom_call.1} parent=5 // pred_check_branch
        %1184 = sbr.rel (%p1182) target = $region52
      $region51: #{tpu_custom_call.1} parent=5 // pred_region
        %s1185 = ssub.s32 %s17, 2
        // Predicated region
        $region53: #{tpu_custom_call.1} parent=51 // pred_check
          %p1186 = pneg %p135
        $region54: #{tpu_custom_call.1} parent=51 // pred_check_branch
          %1188 = sbr.rel (%p1186) target = $region56
        $region55: #{tpu_custom_call.1} parent=51 // pred_region
          %s1189 = sand.u32 %s120, 1
          %s1190 = scalar_lea.sflag [#allocation4], %s1189
          %s1191 = sand.u32 %s120, 1
          %s1192 = smul.addr %s1191, 32
          %s1193 = scalar_lea.vmem [#allocation7], %s1192
          %1194 = dma.done %s1190, 512
        $region56: #{tpu_custom_call.1} parent=51 // pred_fallthru
          _
      $region52: #{tpu_custom_call.1} parent=5 // pred_fallthru
        _
    $region6: #{tpu_custom_call.1} parent=1 // loop_footer
      %s21 = sadd.s32 1, %s17
    $region7: #{tpu_custom_call.1} parent=1 // loop_footer_branch
      %16 = sbr.rel target = $region3
    $region8: #{tpu_custom_call.1} parent=1 // loop_exit
      _
    %1195 = vsyncpa [#allocation3], 1
    %s1196 = scalar_lea.sflag [#allocation3], 1
    %1197 = vsyncpa %s1196, 1
    %1198 = vsyncpa [#allocation6], 1
    %1199 = vsyncpa [#allocation4], 1
    %s1200 = scalar_lea.sflag [#allocation4], 1
    %1201 = vsyncpa %s1200, 1

</llo_original>
